<compile_context>
chip_gen: v7x
topology: tpu7x:2x2x1
jax: 0.10.0
libtpu: 0.0.40
codegen_flags: <defaults>
</compile_context>

<pallas_src>
import jax
import jax.numpy as jnp
from jax import lax
from jax.experimental import pallas as pl
from jax.experimental.pallas import tpu as pltpu

INPUT_DIM = 1          # single input tensor -> Linear(1, hidden)
OUTPUT_DIM = 1
HIDDEN = 25            # hidden_layers_dimension default
DEEP_LAYERS = 5        # deep_layers default
H_SUB = 32             # hidden dim padded to f32 sublane multiple (8)
LANE_CHUNK = 512       # in-kernel lane strip-mine chunk (~16 live vregs / activation)
TILE_N_MAX = 2048      # max batch tile on the lane axis (amortizes per-step overhead)


def _choose_tile_n(n, max_tile=TILE_N_MAX, lane_chunk=LANE_CHUNK):
    """Tile size: multiple of LANE_CHUNK, capped at TILE_N_MAX, and small enough
    that the grid has >= 2 steps when the batch allows (dual-TC v7x)."""
    half = -(-n // 2)                                 # ceil(n / 2)
    t = -(-half // lane_chunk) * lane_chunk           # round up to lane_chunk
    return max(lane_chunk, min(max_tile, t))


def _make_kernel(lane_chunk, n_chunks, mm_dtype):
    def mlp_kernel(x_ref, w_in_ref, b_in_ref, w_mid_ref, b_mid_ref,
                   w_out_ref, b_out_ref, o_ref):
        # Tiny resident weights: load once per grid step.
        w_in = w_in_ref[...]              # (H_SUB, 1)
        b_in = b_in_ref[...]              # (H_SUB, 1)
        w_out = w_out_ref[...]            # (H_SUB, 1)
        b_out = b_out_ref[0, 0]           # scalar from SMEM

        def chunk(start):
            x = x_ref[:, pl.ds(start, lane_chunk)]               # (1, lane_chunk)
            # layer_in (fan_in = 1): rank-1 broadcast on the VPU, no K=1 matmul.
            h = jnp.tanh(w_in * x + b_in)                        # (H_SUB, lane_chunk)
            for l in range(DEEP_LAYERS):                         # static idx, unrolled
                h = jnp.tanh(
                    jnp.dot(w_mid_ref[l], h.astype(mm_dtype),
                            preferred_element_type=jnp.float32)
                    + b_mid_ref[l])
            # layer_out (fan_out = 1): elementwise mul + sublane reduce, no N=1 matmul.
            out = jnp.sum(h * w_out, axis=0, keepdims=True) + b_out
            # forward(): output * Input.squeeze(1) * (Input.squeeze(1) - 1)
            o_ref[:, pl.ds(start, lane_chunk)] = out * (x * (x - 1.0))

        if n_chunks == 1:
            chunk(0)
        else:
            # Strip-mine the lane axis: bounds live vregs per chunk (no spills)
            # while keeping the big tile for DMA / per-step-overhead amortization.
            def body(c, carry):
                chunk(pl.multiple_of(c * lane_chunk, lane_chunk))
                return carry
            lax.fori_loop(0, n_chunks, body, 0)

    return mlp_kernel


def neural_network_forward(x, w_in, b_in, w_mid, b_mid, w_out, b_out,
                           *, tile_n=None):
    """x: (N,) float32. Returns (N,) float32, matching torch forward(x)."""
    n = x.shape[0]
    if tile_n is None:
        tile_n = _choose_tile_n(n)
    tile_n = max(LANE_CHUNK, (tile_n // LANE_CHUNK) * LANE_CHUNK)
    n_tiles = pl.cdiv(n, tile_n)
    n_pad = n_tiles * tile_n

    # One cheap zero-pad (no scatter-into-zeros copy); free reshape when aligned.
    x_row = (x if n_pad == n else jnp.pad(x, (0, n_pad - n))).reshape(1, n_pad)

    kernel = _make_kernel(LANE_CHUNK, tile_n // LANE_CHUNK, w_mid.dtype)

    out = pl.pallas_call(
        kernel,
        out_shape=jax.ShapeDtypeStruct((1, n_pad), jnp.float32),
        grid_spec=pltpu.PrefetchScalarGridSpec(
            num_scalar_prefetch=0,
            grid=(n_tiles,),
            in_specs=[
                pl.BlockSpec((1, tile_n), lambda i: (0, i)),                     # x
                pl.BlockSpec((H_SUB, INPUT_DIM), lambda i: (0, 0)),              # w_in
                pl.BlockSpec((H_SUB, 1), lambda i: (0, 0)),                      # b_in
                pl.BlockSpec((DEEP_LAYERS, H_SUB, H_SUB), lambda i: (0, 0, 0)),  # w_mid
                pl.BlockSpec((DEEP_LAYERS, H_SUB, 1), lambda i: (0, 0, 0)),      # b_mid
                pl.BlockSpec((H_SUB, OUTPUT_DIM), lambda i: (0, 0)),             # w_out
                pl.BlockSpec(memory_space=pltpu.MemorySpace.SMEM),               # b_out
            ],
            out_specs=pl.BlockSpec((1, tile_n), lambda i: (0, i)),
        ),
        compiler_params=pltpu.CompilerParams(
            dimension_semantics=("parallel",)),
    )(x_row, w_in, b_in, w_mid, b_mid, w_out, b_out)

    out_flat = out.reshape(n_pad)
    return out_flat if n_pad == n else out_flat[:n]


def init_params(key):
    """Deterministic params mimicking torch.nn.Linear default init
    (U(-1/sqrt(fan_in), 1/sqrt(fan_in))), stored in torch (out, in) layout."""
    keys = jax.random.split(key, 2 * (DEEP_LAYERS + 2))

    def linear(kw, kb, fan_in, fan_out):
        bound = 1.0 / float(fan_in) ** 0.5
        w = jax.random.uniform(kw, (fan_out, fan_in), jnp.float32, -bound, bound)
        b = jax.random.uniform(kb, (fan_out,), jnp.float32, -bound, bound)
        return w, b

    w_in, b_in = linear(keys[0], keys[1], INPUT_DIM, HIDDEN)
    w_mid, b_mid = [], []
    for l in range(DEEP_LAYERS):
        w, b = linear(keys[2 + 2 * l], keys[3 + 2 * l], HIDDEN, HIDDEN)
        w_mid.append(w)
        b_mid.append(b)
    w_out, b_out = linear(keys[-2], keys[-1], HIDDEN, OUTPUT_DIM)
    return (w_in, b_in, jnp.stack(w_mid), jnp.stack(b_mid), w_out, b_out)


def pad_params(w_in, b_in, w_mid, b_mid, w_out, b_out, *, matmul_dtype=jnp.float32):
    """Zero-pad HIDDEN (25) -> H_SUB (32) on the sublane axis (exact padding).
    matmul_dtype=bf16 pre-casts the mid-layer weights once (MXU single-pass);
    biases and the degenerate first/last layers stay f32."""
    w_in_p = jnp.zeros((H_SUB, INPUT_DIM), jnp.float32).at[:HIDDEN, :].set(w_in)
    b_in_p = jnp.zeros((H_SUB, 1), jnp.float32).at[:HIDDEN, 0].set(b_in)
    w_mid_p = (jnp.zeros((DEEP_LAYERS, H_SUB, H_SUB), jnp.float32)
               .at[:, :HIDDEN, :HIDDEN].set(w_mid)).astype(matmul_dtype)
    b_mid_p = (jnp.zeros((DEEP_LAYERS, H_SUB, 1), jnp.float32)
               .at[:, :HIDDEN, 0].set(b_mid))
    w_out_p = (jnp.zeros((H_SUB, OUTPUT_DIM), jnp.float32)
               .at[:HIDDEN, :].set(w_out.T))
    b_out_p = b_out.reshape(1, OUTPUT_DIM).astype(jnp.float32)
    return w_in_p, b_in_p, w_mid_p, b_mid_p, w_out_p, b_out_p


def reference_forward(x, w_in, b_in, w_mid, b_mid, w_out, b_out):
    """Pure-JAX replica of the torch forward pass (unpadded, torch layout)."""
    inp = x[:, None]
    h = jnp.tanh(inp @ w_in.T + b_in)
    for l in range(DEEP_LAYERS):
        h = jnp.tanh(h @ w_mid[l].T + b_mid[l])
    out = (h @ w_out.T + b_out)[:, 0]
    return out * x * (x - 1.0)


if __name__ == "__main__":
    key = jax.random.PRNGKey(0)
    k_param, k_x = jax.random.split(key)

    params = init_params(k_param)

    N = 2000                 # not a multiple of the tile: exercises wrapper padding
    x = jax.random.uniform(k_x, (N,), jnp.float32)   # collocation points in [0, 1)
    y_ref = reference_forward(x, *params)

    # f32 path (default): bit-level-tight check against the reference.
    padded_f32 = pad_params(*params, matmul_dtype=jnp.float32)
    y = jax.block_until_ready(neural_network_forward(x, *padded_f32))
    assert y.shape == (N,)
    assert jnp.allclose(y, y_ref, atol=1e-5, rtol=1e-5), "f32 mismatch vs reference"

    # bf16 matmul-operand path (perf): single-pass MXU, f32 accumulation.
    padded_bf16 = pad_params(*params, matmul_dtype=jnp.bfloat16)
    y_bf16 = jax.block_until_ready(neural_network_forward(x, *padded_bf16))
    assert y_bf16.shape == (N,)
    assert jnp.allclose(y_bf16, y_ref, atol=1e-2, rtol=1e-2), "bf16 mismatch vs reference"

    print("KERNEL_OK")
</pallas_src>

<mosaic_0001>
module attributes {stable_mosaic.version = 11 : i64} {
  func.func @mlp_kernel(%arg0: i32, %arg1: memref<1x1024xf32, #tpu.memory_space<vmem>>, %arg2: memref<32x1xf32, #tpu.memory_space<vmem>>, %arg3: memref<32x1xf32, #tpu.memory_space<vmem>>, %arg4: memref<5x32x32xf32, #tpu.memory_space<vmem>>, %arg5: memref<5x32x1xf32, #tpu.memory_space<vmem>>, %arg6: memref<32x1xf32, #tpu.memory_space<vmem>>, %arg7: memref<1x1xf32, #tpu.memory_space<smem>>, %arg8: memref<1x1024xf32, #tpu.memory_space<vmem>>) attributes {dimension_semantics = [#tpu.dimension_semantics<parallel>], iteration_bounds = array<i64: 2>, scalar_prefetch = 0 : i64, scratch_operands = 0 : i64, tpu.core_type = #tpu.core_type<tc>, window_params = [{transform_indices = @transform_0, window_bounds = array<i64: 1, 1024>}, {pipeline_mode = #tpu.pipeline_mode<synchronous>, transform_indices = @transform_1, window_bounds = array<i64: 32, 1>}, {pipeline_mode = #tpu.pipeline_mode<synchronous>, transform_indices = @transform_2, window_bounds = array<i64: 32, 1>}, {pipeline_mode = #tpu.pipeline_mode<synchronous>, transform_indices = @transform_3, window_bounds = array<i64: 5, 32, 32>}, {pipeline_mode = #tpu.pipeline_mode<synchronous>, transform_indices = @transform_4, window_bounds = array<i64: 5, 32, 1>}, {pipeline_mode = #tpu.pipeline_mode<synchronous>, transform_indices = @transform_5, window_bounds = array<i64: 32, 1>}, {transform_indices = @transform_6, window_bounds = array<i64: 1, 1>}, {transform_indices = @transform_7, window_bounds = array<i64: 1, 1024>}]} {
    %c0 = arith.constant 0 : index
    %c0_0 = arith.constant 0 : index
    %0 = vector.load %arg2[%c0, %c0_0] : memref<32x1xf32, #tpu.memory_space<vmem>>, vector<32x1xf32>
    %c0_1 = arith.constant 0 : index
    %c0_2 = arith.constant 0 : index
    %1 = vector.load %arg3[%c0_1, %c0_2] : memref<32x1xf32, #tpu.memory_space<vmem>>, vector<32x1xf32>
    %c0_3 = arith.constant 0 : index
    %c0_4 = arith.constant 0 : index
    %2 = vector.load %arg6[%c0_3, %c0_4] : memref<32x1xf32, #tpu.memory_space<vmem>>, vector<32x1xf32>
    %c0_5 = arith.constant 0 : index
    %c0_6 = arith.constant 0 : index
    %3 = memref.load %arg7[%c0_5, %c0_6] : memref<1x1xf32, #tpu.memory_space<smem>>
    %c0_i32 = arith.constant 0 : i32
    %c2_i32 = arith.constant 2 : i32
    %4 = arith.addi %c0_i32, %c2_i32 : i32
    %c1_i32 = arith.constant 1 : i32
    scf.for %arg9 = %c0_i32 to %4 step %c1_i32  : i32 {
      %c512_i32 = arith.constant 512 : i32
      %5 = arith.muli %arg9, %c512_i32 : i32
      %6 = tpu.assume_multiple %5, 512 : i32
      %c0_8 = arith.constant 0 : index
      %7 = arith.index_cast %6 : i32 to index
      %8 = vector.load %arg1[%c0_8, %7] : memref<1x1024xf32, #tpu.memory_space<vmem>>, vector<1x512xf32>
      %9 = vector.broadcast %0 : vector<32x1xf32> to vector<32x512xf32>
      %10 = vector.broadcast %8 : vector<1x512xf32> to vector<32x512xf32>
      %11 = arith.mulf %9, %10 : vector<32x512xf32>
      %12 = vector.broadcast %1 : vector<32x1xf32> to vector<32x512xf32>
      %13 = arith.addf %11, %12 : vector<32x512xf32>
      %14 = math.tanh %13 : vector<32x512xf32>
      %c0_9 = arith.constant 0 : index
      %c0_10 = arith.constant 0 : index
      %c0_11 = arith.constant 0 : index
      %15 = vector.load %arg4[%c0_9, %c0_10, %c0_11] : memref<5x32x32xf32, #tpu.memory_space<vmem>>, vector<1x32x32xf32>
      %16 = vector.shape_cast %15 : vector<1x32x32xf32> to vector<32x32xf32>
      %cst = arith.constant dense<0.000000e+00> : vector<32x512xf32>
      %17 = tpu.matmul %16, %14, %cst {dimension_numbers = #tpu.dot_dimension_numbers<[1], [0], [0], [1], [0, 0, 1, 1], [], []>} : vector<32x32xf32>, vector<32x512xf32>, vector<32x512xf32> -> vector<32x512xf32>
      %c0_12 = arith.constant 0 : index
      %c0_13 = arith.constant 0 : index
      %c0_14 = arith.constant 0 : index
      %18 = vector.load %arg5[%c0_12, %c0_13, %c0_14] : memref<5x32x1xf32, #tpu.memory_space<vmem>>, vector<1x32x1xf32>
      %19 = vector.shape_cast %18 : vector<1x32x1xf32> to vector<32x1xf32>
      %20 = vector.broadcast %19 : vector<32x1xf32> to vector<32x512xf32>
      %21 = arith.addf %17, %20 : vector<32x512xf32>
      %22 = math.tanh %21 : vector<32x512xf32>
      %c1 = arith.constant 1 : index
      %c0_15 = arith.constant 0 : index
      %c0_16 = arith.constant 0 : index
      %23 = vector.load %arg4[%c1, %c0_15, %c0_16] : memref<5x32x32xf32, #tpu.memory_space<vmem>>, vector<1x32x32xf32>
      %24 = vector.shape_cast %23 : vector<1x32x32xf32> to vector<32x32xf32>
      %cst_17 = arith.constant dense<0.000000e+00> : vector<32x512xf32>
      %25 = tpu.matmul %24, %22, %cst_17 {dimension_numbers = #tpu.dot_dimension_numbers<[1], [0], [0], [1], [0, 0, 1, 1], [], []>} : vector<32x32xf32>, vector<32x512xf32>, vector<32x512xf32> -> vector<32x512xf32>
      %c1_18 = arith.constant 1 : index
      %c0_19 = arith.constant 0 : index
      %c0_20 = arith.constant 0 : index
      %26 = vector.load %arg5[%c1_18, %c0_19, %c0_20] : memref<5x32x1xf32, #tpu.memory_space<vmem>>, vector<1x32x1xf32>
      %27 = vector.shape_cast %26 : vector<1x32x1xf32> to vector<32x1xf32>
      %28 = vector.broadcast %27 : vector<32x1xf32> to vector<32x512xf32>
      %29 = arith.addf %25, %28 : vector<32x512xf32>
      %30 = math.tanh %29 : vector<32x512xf32>
      %c2 = arith.constant 2 : index
      %c0_21 = arith.constant 0 : index
      %c0_22 = arith.constant 0 : index
      %31 = vector.load %arg4[%c2, %c0_21, %c0_22] : memref<5x32x32xf32, #tpu.memory_space<vmem>>, vector<1x32x32xf32>
      %32 = vector.shape_cast %31 : vector<1x32x32xf32> to vector<32x32xf32>
      %cst_23 = arith.constant dense<0.000000e+00> : vector<32x512xf32>
      %33 = tpu.matmul %32, %30, %cst_23 {dimension_numbers = #tpu.dot_dimension_numbers<[1], [0], [0], [1], [0, 0, 1, 1], [], []>} : vector<32x32xf32>, vector<32x512xf32>, vector<32x512xf32> -> vector<32x512xf32>
      %c2_24 = arith.constant 2 : index
      %c0_25 = arith.constant 0 : index
      %c0_26 = arith.constant 0 : index
      %34 = vector.load %arg5[%c2_24, %c0_25, %c0_26] : memref<5x32x1xf32, #tpu.memory_space<vmem>>, vector<1x32x1xf32>
      %35 = vector.shape_cast %34 : vector<1x32x1xf32> to vector<32x1xf32>
      %36 = vector.broadcast %35 : vector<32x1xf32> to vector<32x512xf32>
      %37 = arith.addf %33, %36 : vector<32x512xf32>
      %38 = math.tanh %37 : vector<32x512xf32>
      %c3 = arith.constant 3 : index
      %c0_27 = arith.constant 0 : index
      %c0_28 = arith.constant 0 : index
      %39 = vector.load %arg4[%c3, %c0_27, %c0_28] : memref<5x32x32xf32, #tpu.memory_space<vmem>>, vector<1x32x32xf32>
      %40 = vector.shape_cast %39 : vector<1x32x32xf32> to vector<32x32xf32>
      %cst_29 = arith.constant dense<0.000000e+00> : vector<32x512xf32>
      %41 = tpu.matmul %40, %38, %cst_29 {dimension_numbers = #tpu.dot_dimension_numbers<[1], [0], [0], [1], [0, 0, 1, 1], [], []>} : vector<32x32xf32>, vector<32x512xf32>, vector<32x512xf32> -> vector<32x512xf32>
      %c3_30 = arith.constant 3 : index
      %c0_31 = arith.constant 0 : index
      %c0_32 = arith.constant 0 : index
      %42 = vector.load %arg5[%c3_30, %c0_31, %c0_32] : memref<5x32x1xf32, #tpu.memory_space<vmem>>, vector<1x32x1xf32>
      %43 = vector.shape_cast %42 : vector<1x32x1xf32> to vector<32x1xf32>
      %44 = vector.broadcast %43 : vector<32x1xf32> to vector<32x512xf32>
      %45 = arith.addf %41, %44 : vector<32x512xf32>
      %46 = math.tanh %45 : vector<32x512xf32>
      %c4 = arith.constant 4 : index
      %c0_33 = arith.constant 0 : index
      %c0_34 = arith.constant 0 : index
      %47 = vector.load %arg4[%c4, %c0_33, %c0_34] : memref<5x32x32xf32, #tpu.memory_space<vmem>>, vector<1x32x32xf32>
      %48 = vector.shape_cast %47 : vector<1x32x32xf32> to vector<32x32xf32>
      %cst_35 = arith.constant dense<0.000000e+00> : vector<32x512xf32>
      %49 = tpu.matmul %48, %46, %cst_35 {dimension_numbers = #tpu.dot_dimension_numbers<[1], [0], [0], [1], [0, 0, 1, 1], [], []>} : vector<32x32xf32>, vector<32x512xf32>, vector<32x512xf32> -> vector<32x512xf32>
      %c4_36 = arith.constant 4 : index
      %c0_37 = arith.constant 0 : index
      %c0_38 = arith.constant 0 : index
      %50 = vector.load %arg5[%c4_36, %c0_37, %c0_38] : memref<5x32x1xf32, #tpu.memory_space<vmem>>, vector<1x32x1xf32>
      %51 = vector.shape_cast %50 : vector<1x32x1xf32> to vector<32x1xf32>
      %52 = vector.broadcast %51 : vector<32x1xf32> to vector<32x512xf32>
      %53 = arith.addf %49, %52 : vector<32x512xf32>
      %54 = math.tanh %53 : vector<32x512xf32>
      %55 = vector.broadcast %2 : vector<32x1xf32> to vector<32x512xf32>
      %56 = arith.mulf %54, %55 : vector<32x512xf32>
      %cst_39 = arith.constant dense<0.000000e+00> : vector<512xf32>
      %57 = vector.multi_reduction <add>, %56, %cst_39 [0] : vector<32x512xf32> to vector<512xf32>
      %58 = vector.shape_cast %57 : vector<512xf32> to vector<1x512xf32>
      %59 = vector.broadcast %3 : f32 to vector<1x512xf32>
      %60 = arith.addf %58, %59 : vector<1x512xf32>
      %cst_40 = arith.constant 1.000000e+00 : f32
      %61 = vector.broadcast %cst_40 : f32 to vector<1x512xf32>
      %62 = arith.subf %8, %61 : vector<1x512xf32>
      %63 = arith.mulf %8, %62 : vector<1x512xf32>
      %64 = arith.mulf %60, %63 : vector<1x512xf32>
      %c0_41 = arith.constant 0 : index
      %65 = arith.index_cast %6 : i32 to index
      %66 = vector.load %arg8[%c0_41, %65] : memref<1x1024xf32, #tpu.memory_space<vmem>>, vector<1x512xf32>
      tpu.vector_store %arg8[%c0_41, %65], %64 {strides = array<i32>} : memref<1x1024xf32, #tpu.memory_space<vmem>>, vector<1x512xf32>,
    }
    %c2_i32_7 = arith.constant 2 : i32
    return
  }
  func.func @transform_0(%arg0: i32) -> (i32, i32) {
    %c0_i32 = arith.constant 0 : i32
    %c0_i32_0 = arith.constant 0 : i32
    return %c0_i32, %arg0 : i32, i32
  }
  func.func @transform_1(%arg0: i32) -> (i32, i32) {
    %c0_i32 = arith.constant 0 : i32
    %c0_i32_0 = arith.constant 0 : i32
    %c0_i32_1 = arith.constant 0 : i32
    return %c0_i32, %c0_i32_0 : i32, i32
  }
  func.func @transform_2(%arg0: i32) -> (i32, i32) {
    %c0_i32 = arith.constant 0 : i32
    %c0_i32_0 = arith.constant 0 : i32
    %c0_i32_1 = arith.constant 0 : i32
    return %c0_i32, %c0_i32_0 : i32, i32
  }
  func.func @transform_3(%arg0: i32) -> (i32, i32, i32) {
    %c0_i32 = arith.constant 0 : i32
    %c0_i32_0 = arith.constant 0 : i32
    %c0_i32_1 = arith.constant 0 : i32
    %c0_i32_2 = arith.constant 0 : i32
    return %c0_i32, %c0_i32_0, %c0_i32_1 : i32, i32, i32
  }
  func.func @transform_4(%arg0: i32) -> (i32, i32, i32) {
    %c0_i32 = arith.constant 0 : i32
    %c0_i32_0 = arith.constant 0 : i32
    %c0_i32_1 = arith.constant 0 : i32
    %c0_i32_2 = arith.constant 0 : i32
    return %c0_i32, %c0_i32_0, %c0_i32_1 : i32, i32, i32
  }
  func.func @transform_5(%arg0: i32) -> (i32, i32) {
    %c0_i32 = arith.constant 0 : i32
    %c0_i32_0 = arith.constant 0 : i32
    %c0_i32_1 = arith.constant 0 : i32
    return %c0_i32, %c0_i32_0 : i32, i32
  }
  func.func @transform_6(%arg0: i32) -> (i32, i32) {
    %c0_i32 = arith.constant 0 : i32
    %c0_i32_0 = arith.constant 0 : i32
    %c0_i32_1 = arith.constant 0 : i32
    return %c0_i32, %c0_i32_0 : i32, i32
  }
  func.func @transform_7(%arg0: i32) -> (i32, i32) {
    %c0_i32 = arith.constant 0 : i32
    %c0_i32_0 = arith.constant 0 : i32
    return %c0_i32, %arg0 : i32, i32
  }
}

</mosaic_0001>

<llo_original>
// kernel: tpu_custom_call.1
$region0: #{tpu_custom_call.1}
  #allocation0 [shape = 'u32[]', space=smem, size = 0x4, offset = 0x4, fixed_abs, tag = 'smem constant byte address 0x4 - core index']
  #allocation1 [shape = 'u32[144,128]{1,0:T(1,128)}', space=vmem, size = 0x12000, scoped, tag = 'internal scratch']
  #allocation2 [shape = 'f32[1,1]{1,0:T(1,128)S(6)}', space=smem, size = 0x200, scoped, tag = 'scoped memory for tpu_custom_call.1']
  %s0 = inlined_call_operand.vmem [shape: f32[1,2048], index: 0, kind: input, shape index: {}]
  %s1 = inlined_call_operand.vmem [shape: f32[32,1], index: 1, kind: input, shape index: {}]
  %s2 = inlined_call_operand.vmem [shape: f32[32,1], index: 2, kind: input, shape index: {}]
  %s3 = inlined_call_operand.vmem [shape: f32[5,32,32], index: 3, kind: input, shape index: {}]
  %s4 = inlined_call_operand.vmem [shape: f32[5,32,1], index: 4, kind: input, shape index: {}]
  %s5 = inlined_call_operand.vmem [shape: f32[32,1], index: 5, kind: input, shape index: {}]
  %s6 = inlined_call_operand.<no memory space> [shape: f32[1,1], index: 6, kind: input, shape index: {}]
  %s7 = inlined_call_operand.hbm [shape: f32[1,2048], index: 7, kind: output, shape index: {}]
  %s8 = sld [smem:[#allocation0]]
  $region68: #{tpu_custom_call.1} parent=0
    _
  %s10 = ssub.s32 1, %s8
  %s11 = scalar_select 0, %s10, %s8
  %12 = sst [smem:[#allocation2]] %s6
  $region1: #{tpu_custom_call.1} parent=0
    #allocation3 [shape = 'u8[8192]{0}', space=vmem, size = 0x2000, scoped, tag = 'output window, operand 0']
    #allocation4 [shape = 's32[2]{0}', space=sflag, size = 0x8, scoped, tag = 'scoped memory for tpu_custom_call.1']
    %13 = vsyncpa [#allocation4], 0
    %s14 = scalar_lea.sflag [#allocation4], 1
    %15 = vsyncpa %s14, 0
    loop: start=0, step=1, limit=4
    $region2: #{tpu_custom_call.1} parent=1 // loop_pre_header
      _
    $region3: #{tpu_custom_call.1} parent=1 // loop_header
      %s17 = sphi 0, %s21
      %p18 = scmp.ge.s32.totalorder %s17, 4
      %s27 = sphi 0, %s29
      %s30 = sphi 0, %s27
      %s31 = sphi 0, %s30
      %s47 = sphi 0, %s31
      %s51 = sphi 0, %s51
      %s53 = sphi 0, %s51
      %s54 = sphi 0, %s53
      %s68 = sphi 0, %s54
      %s72 = sphi 0, %s72
      %s74 = sphi 0, %s72
      %s75 = sphi 0, %s74
      %s89 = sphi 0, %s75
      %s93 = sphi 0, %s93
      %s95 = sphi 0, %s93
      %s96 = sphi 0, %s95
      %s110 = sphi 0, %s96
      %s114 = sphi 0, %s114
      %s116 = sphi 0, %s114
      %s117 = sphi 0, %s116
      %s131 = sphi 0, %s117
      %s135 = sphi 0, %s135
      %s137 = sphi 0, %s135
      %s138 = sphi 0, %s137
      %s152 = sphi 0, %s138
      %s156 = sphi 0, %s156
      %s158 = sphi 0, %s156
      %s159 = sphi 0, %s158
      %s173 = sphi 0, %s159
      %s179 = sphi 0, %s181
      %s182 = sphi 0, %s179
      %s183 = sphi 0, %s182
      %s199 = sphi 0, %s183
    $region4: #{tpu_custom_call.1} parent=1 // loop_header_branch
      %20 = sbr.rel (%p18) target = $region8
    $region5: #{tpu_custom_call.1} parent=1 // loop_body
      %s22 = ssub.s32 %s17, 1
      %s23 = ssub.s32 %s17, 2
      %s24 = sadd.s32 %s17, 1
      %s25 = ssub.s32 %s17, %s24
      %p26 = scmp.eq.s32.totalorder %s25, 0
      %s28 = sadd.s32 %s27, 1
      %s29 = scalar_select %p26, %s27, %s28
      %p32 = pneg %p26
      %p33 = scmp.eq.s32.totalorder %s17, 1
      %p34 = por %p32, %p33
      %p35 = scmp.ne.s32.totalorder %s27, %s30
      %p36 = scmp.eq.s32.totalorder %s17, 0
      %p37 = por %p35, %p36
      %p38 = scmp.ne.s32.totalorder %s27, %s30
      %p39 = scmp.eq.s32.totalorder %s22, 1
      %p40 = por %p38, %p39
      %p41 = scmp.ne.s32.totalorder %s30, %s31
      %p42 = scmp.eq.s32.totalorder %s22, 0
      %p43 = por %p41, %p42
      %p44 = scmp.ne.s32.totalorder %s30, %s31
      %p45 = scmp.eq.s32.totalorder %s23, 1
      %p46 = por %p44, %p45
      %p48 = scmp.ne.s32.totalorder %s31, %s47
      %p49 = scmp.eq.s32.totalorder %s23, 0
      %p50 = por %p48, %p49
      %s52 = sadd.s32 %s51, 1
      %p55 = scmp.eq.s32.totalorder %s17, 1
      %p56 = scmp.ne.s32.totalorder %s51, %s53
      %p57 = scmp.eq.s32.totalorder %s17, 0
      %p58 = por %p56, %p57
      %p59 = scmp.ne.s32.totalorder %s51, %s53
      %p60 = scmp.eq.s32.totalorder %s22, 1
      %p61 = por %p59, %p60
      %p62 = scmp.ne.s32.totalorder %s53, %s54
      %p63 = scmp.eq.s32.totalorder %s22, 0
      %p64 = por %p62, %p63
      %p65 = scmp.ne.s32.totalorder %s53, %s54
      %p66 = scmp.eq.s32.totalorder %s23, 1
      %p67 = por %p65, %p66
      %p69 = scmp.ne.s32.totalorder %s54, %s68
      %p70 = scmp.eq.s32.totalorder %s23, 0
      %p71 = por %p69, %p70
      %s73 = sadd.s32 %s72, 1
      %p76 = scmp.eq.s32.totalorder %s17, 1
      %p77 = scmp.ne.s32.totalorder %s72, %s74
      %p78 = scmp.eq.s32.totalorder %s17, 0
      %p79 = por %p77, %p78
      %p80 = scmp.ne.s32.totalorder %s72, %s74
      %p81 = scmp.eq.s32.totalorder %s22, 1
      %p82 = por %p80, %p81
      %p83 = scmp.ne.s32.totalorder %s74, %s75
      %p84 = scmp.eq.s32.totalorder %s22, 0
      %p85 = por %p83, %p84
      %p86 = scmp.ne.s32.totalorder %s74, %s75
      %p87 = scmp.eq.s32.totalorder %s23, 1
      %p88 = por %p86, %p87
      %p90 = scmp.ne.s32.totalorder %s75, %s89
      %p91 = scmp.eq.s32.totalorder %s23, 0
      %p92 = por %p90, %p91
      %s94 = sadd.s32 %s93, 1
      %p97 = scmp.eq.s32.totalorder %s17, 1
      %p98 = scmp.ne.s32.totalorder %s93, %s95
      %p99 = scmp.eq.s32.totalorder %s17, 0
      %p100 = por %p98, %p99
      %p101 = scmp.ne.s32.totalorder %s93, %s95
      %p102 = scmp.eq.s32.totalorder %s22, 1
      %p103 = por %p101, %p102
      %p104 = scmp.ne.s32.totalorder %s95, %s96
      %p105 = scmp.eq.s32.totalorder %s22, 0
      %p106 = por %p104, %p105
      %p107 = scmp.ne.s32.totalorder %s95, %s96
      %p108 = scmp.eq.s32.totalorder %s23, 1
      %p109 = por %p107, %p108
      %p111 = scmp.ne.s32.totalorder %s96, %s110
      %p112 = scmp.eq.s32.totalorder %s23, 0
      %p113 = por %p111, %p112
      %s115 = sadd.s32 %s114, 1
      %p118 = scmp.eq.s32.totalorder %s17, 1
      %p119 = scmp.ne.s32.totalorder %s114, %s116
      %p120 = scmp.eq.s32.totalorder %s17, 0
      %p121 = por %p119, %p120
      %p122 = scmp.ne.s32.totalorder %s114, %s116
      %p123 = scmp.eq.s32.totalorder %s22, 1
      %p124 = por %p122, %p123
      %p125 = scmp.ne.s32.totalorder %s116, %s117
      %p126 = scmp.eq.s32.totalorder %s22, 0
      %p127 = por %p125, %p126
      %p128 = scmp.ne.s32.totalorder %s116, %s117
      %p129 = scmp.eq.s32.totalorder %s23, 1
      %p130 = por %p128, %p129
      %p132 = scmp.ne.s32.totalorder %s117, %s131
      %p133 = scmp.eq.s32.totalorder %s23, 0
      %p134 = por %p132, %p133
      %s136 = sadd.s32 %s135, 1
      %p139 = scmp.eq.s32.totalorder %s17, 1
      %p140 = scmp.ne.s32.totalorder %s135, %s137
      %p141 = scmp.eq.s32.totalorder %s17, 0
      %p142 = por %p140, %p141
      %p143 = scmp.ne.s32.totalorder %s135, %s137
      %p144 = scmp.eq.s32.totalorder %s22, 1
      %p145 = por %p143, %p144
      %p146 = scmp.ne.s32.totalorder %s137, %s138
      %p147 = scmp.eq.s32.totalorder %s22, 0
      %p148 = por %p146, %p147
      %p149 = scmp.ne.s32.totalorder %s137, %s138
      %p150 = scmp.eq.s32.totalorder %s23, 1
      %p151 = por %p149, %p150
      %p153 = scmp.ne.s32.totalorder %s138, %s152
      %p154 = scmp.eq.s32.totalorder %s23, 0
      %p155 = por %p153, %p154
      %s157 = sadd.s32 %s156, 1
      %p160 = scmp.eq.s32.totalorder %s17, 1
      %p161 = scmp.ne.s32.totalorder %s156, %s158
      %p162 = scmp.eq.s32.totalorder %s17, 0
      %p163 = por %p161, %p162
      %p164 = scmp.ne.s32.totalorder %s156, %s158
      %p165 = scmp.eq.s32.totalorder %s22, 1
      %p166 = por %p164, %p165
      %p167 = scmp.ne.s32.totalorder %s158, %s159
      %p168 = scmp.eq.s32.totalorder %s22, 0
      %p169 = por %p167, %p168
      %p170 = scmp.ne.s32.totalorder %s158, %s159
      %p171 = scmp.eq.s32.totalorder %s23, 1
      %p172 = por %p170, %p171
      %p174 = scmp.ne.s32.totalorder %s159, %s173
      %p175 = scmp.eq.s32.totalorder %s23, 0
      %p176 = por %p174, %p175
      %s177 = ssub.s32 %s17, %s24
      %p178 = scmp.eq.s32.totalorder %s177, 0
      %s180 = sadd.s32 %s179, 1
      %s181 = scalar_select %p178, %s179, %s180
      %p184 = pneg %p178
      %p185 = scmp.eq.s32.totalorder %s17, 1
      %p186 = por %p184, %p185
      %p187 = scmp.ne.s32.totalorder %s179, %s182
      %p188 = scmp.eq.s32.totalorder %s17, 0
      %p189 = por %p187, %p188
      %p190 = scmp.ne.s32.totalorder %s179, %s182
      %p191 = scmp.eq.s32.totalorder %s22, 1
      %p192 = por %p190, %p191
      %p193 = scmp.ne.s32.totalorder %s182, %s183
      %p194 = scmp.eq.s32.totalorder %s22, 0
      %p195 = por %p193, %p194
      %p196 = scmp.ne.s32.totalorder %s182, %s183
      %p197 = scmp.eq.s32.totalorder %s23, 1
      %p198 = por %p196, %p197
      %p200 = scmp.ne.s32.totalorder %s183, %s199
      %p201 = scmp.eq.s32.totalorder %s23, 0
      %p202 = por %p200, %p201
      %p203 = scmp.le.s32.totalorder 1, %s17
      %p204 = scmp.lt.s32.totalorder %s17, 3
      %p205 = pnand %p203, %p204
      %p206 = pneg %p205
      // Predicated region
      $region9: #{tpu_custom_call.1} parent=5 // pred_check
        _
      $region10: #{tpu_custom_call.1} parent=5 // pred_check_branch
        %208 = sbr.rel (%p205) target = $region12
      $region11: #{tpu_custom_call.1} parent=5 // pred_region
        %s209 = ssub.s32 %s17, 1
        // Predicated region
        $region13: #{tpu_custom_call.1} parent=11 // pred_check
          %p210 = pneg %p64
        $region14: #{tpu_custom_call.1} parent=11 // pred_check_branch
          %212 = sbr.rel (%p210) target = $region16
        $region15: #{tpu_custom_call.1} parent=11 // pred_region
          _
        $region16: #{tpu_custom_call.1} parent=11 // pred_fallthru
          _
        // Predicated region
        $region17: #{tpu_custom_call.1} parent=11 // pred_check
          %p213 = pneg %p85
        $region18: #{tpu_custom_call.1} parent=11 // pred_check_branch
          %215 = sbr.rel (%p213) target = $region20
        $region19: #{tpu_custom_call.1} parent=11 // pred_region
          _
        $region20: #{tpu_custom_call.1} parent=11 // pred_fallthru
          _
        // Predicated region
        $region21: #{tpu_custom_call.1} parent=11 // pred_check
          %p216 = pneg %p106
        $region22: #{tpu_custom_call.1} parent=11 // pred_check_branch
          %218 = sbr.rel (%p216) target = $region24
        $region23: #{tpu_custom_call.1} parent=11 // pred_region
          _
        $region24: #{tpu_custom_call.1} parent=11 // pred_fallthru
          _
        // Predicated region
        $region25: #{tpu_custom_call.1} parent=11 // pred_check
          %p219 = pneg %p127
        $region26: #{tpu_custom_call.1} parent=11 // pred_check_branch
          %221 = sbr.rel (%p219) target = $region28
        $region27: #{tpu_custom_call.1} parent=11 // pred_region
          _
        $region28: #{tpu_custom_call.1} parent=11 // pred_fallthru
          _
        // Predicated region
        $region29: #{tpu_custom_call.1} parent=11 // pred_check
          %p222 = pneg %p148
        $region30: #{tpu_custom_call.1} parent=11 // pred_check_branch
          %224 = sbr.rel (%p222) target = $region32
        $region31: #{tpu_custom_call.1} parent=11 // pred_region
          _
        $region32: #{tpu_custom_call.1} parent=11 // pred_fallthru
          _
        // Predicated region
        $region33: #{tpu_custom_call.1} parent=11 // pred_check
          %p225 = pneg %p169
        $region34: #{tpu_custom_call.1} parent=11 // pred_check_branch
          %227 = sbr.rel (%p225) target = $region36
        $region35: #{tpu_custom_call.1} parent=11 // pred_region
          _
        $region36: #{tpu_custom_call.1} parent=11 // pred_fallthru
          _
      $region12: #{tpu_custom_call.1} parent=5 // pred_fallthru
        _
      %p228 = scmp.lt.s32.totalorder %s17, 2
      // Predicated region
      $region37: #{tpu_custom_call.1} parent=5 // pred_check
        %p229 = pneg %p228
      $region38: #{tpu_custom_call.1} parent=5 // pred_check_branch
        %231 = sbr.rel (%p229) target = $region40
      $region39: #{tpu_custom_call.1} parent=5 // pred_region
        // Predicated region
        $region41: #{tpu_custom_call.1} parent=39 // pred_check
          %p232 = pneg %p37
        $region42: #{tpu_custom_call.1} parent=39 // pred_check_branch
          %234 = sbr.rel (%p232) target = $region44
        $region43: #{tpu_custom_call.1} parent=39 // pred_region
          %s235 = smul.u32 8, %s17
          %p236 = scmp.lt.s32.totalorder %s235, 15
          %s237 = scalar_select %p236, %s235, 15
          %s238 = scalar_lea.vmem %s0, %s237
          %s239 = smul.u32 8, %s17
        $region44: #{tpu_custom_call.1} parent=39 // pred_fallthru
          _
      $region40: #{tpu_custom_call.1} parent=5 // pred_fallthru
        _
      %p240 = scmp.le.s32.totalorder 1, %s17
      %p241 = scmp.lt.s32.totalorder %s17, 3
      %p242 = pnand %p240, %p241
      %p243 = pneg %p242
      // Predicated region
      $region45: #{tpu_custom_call.1} parent=5 // pred_check
        _
      $region46: #{tpu_custom_call.1} parent=5 // pred_check_branch
        %245 = sbr.rel (%p242) target = $region48
      $region47: #{tpu_custom_call.1} parent=5 // pred_region
        %s246 = ssub.s32 %s17, 1
        %s247 = smul.u32 8, %s22
        %p248 = scmp.lt.s32.totalorder %s247, 15
        %s249 = scalar_select %p248, %s247, 15
        %s250 = scalar_lea.vmem %s0, %s249
        %p251 = pneg %p43
        %p252 = pneg %p40
        %p253 = pneg %p64
        %p254 = pneg %p61
        %p255 = pneg %p85
        %p256 = pneg %p82
        %p257 = pneg %p106
        %p258 = pneg %p103
        %p259 = pneg %p127
        %p260 = pneg %p124
        %p261 = pneg %p148
        %p262 = pneg %p145
        %p263 = pneg %p169
        %p264 = pneg %p166
        %p265 = pneg %p195
        %p266 = pneg %p192
        %s267 = sand.u32 %s182, 1
        %s268 = scalar_lea.sflag [#allocation4], %s267
        %s269 = sand.u32 %s182, 1
        %s270 = smul.addr %s269, 8
        %s271 = scalar_lea.vmem [#allocation3], %s270
        %s272 = smul.u32 8, %s22
        %p273 = scmp.lt.s32.totalorder %s272, 15
        %s274 = scalar_select %p273, %s272, 15
        %s275 = scalar_lea.vmem %s0, %s274
        %s276 = smul.u32 8, %s22
        %s277 = smul.u32 8, %s22
        %v278 = vld [vmem:[%s1] sm:$0xff]
        %v279 = vld [vmem:[%s1 + $0x8] sm:$0xff]
        %v280 = vld [vmem:[%s1 + $0x10] sm:$0xff]
        %v281 = vld [vmem:[%s1 + $0x18] sm:$0xff]
        %v282 = vld [vmem:[%s2] sm:$0xff]
        %v283 = vld [vmem:[%s2 + $0x8] sm:$0xff]
        %v284 = vld [vmem:[%s2 + $0x10] sm:$0xff]
        %v285 = vld [vmem:[%s2 + $0x18] sm:$0xff]
        %v286 = vld [vmem:[%s5] sm:$0xff]
        %v287 = vld [vmem:[%s5 + $0x8] sm:$0xff]
        %v288 = vld [vmem:[%s5 + $0x10] sm:$0xff]
        %v289 = vld [vmem:[%s5 + $0x18] sm:$0xff]
        %s290 = sld [smem:[#allocation2]]
        loop: start=0, step=1, limit=2
        $region49: #{tpu_custom_call.1} parent=47 // loop_pre_header
          _
        $region50: #{tpu_custom_call.1} parent=47 // loop_header
          %s292 = sphi 0, %s296
          %p293 = scmp.ge.s32.totalorder %s292, 2
        $region51: #{tpu_custom_call.1} parent=47 // loop_header_branch
          %295 = sbr.rel (%p293) target = $region55
        $region52: #{tpu_custom_call.1} parent=47 // loop_body
          %s297 = smul.u32 %s292, 512
          %s298 = sshra.s32 %s297, 7
          %s299 = sand.u32 %s297, 127
          %s300 = scalar_lea.vmem %s275, %s298
          %v301 = vld [vmem:[%s300] sm:$0xf]
          %303 = vset.pattern.permute.xlu0 0
          %304 = vperm.xlu0 %303, %v278
          %v305 = vpop.permute.xlu0 %304
          %308 = vset.pattern.permute.xlu0 0
          %309 = vperm.xlu0 %308, %v279
          %v310 = vpop.permute.xlu0 %309
          %313 = vset.pattern.permute.xlu0 0
          %314 = vperm.xlu0 %313, %v280
          %v315 = vpop.permute.xlu0 %314
          %318 = vset.pattern.permute.xlu0 0
          %319 = vperm.xlu0 %318, %v281
          %v320 = vpop.permute.xlu0 %319
          %v323 = vlaneseq
          %v324 = vshrl.u32 %v323, 7
          %v325 = vsub.s32 0, %v324
          %v326 = vrot.slane %v301, %v325
          %v327 = vlaneseq
          %v328 = vshrl.u32 %v327, 7
          %v329 = vsub.s32 1, %v328
          %v330 = vrot.slane %v301, %v329
          %v331 = vlaneseq
          %v332 = vshrl.u32 %v331, 7
          %v333 = vsub.s32 2, %v332
          %v334 = vrot.slane %v301, %v333
          %v335 = vlaneseq
          %v336 = vshrl.u32 %v335, 7
          %v337 = vsub.s32 3, %v336
          %v338 = vrot.slane %v301, %v337
          %v343 = vmul.f32 %v305, %v326
          %v344 = vmul.f32 %v305, %v330
          %v345 = vmul.f32 %v305, %v334
          %v346 = vmul.f32 %v305, %v338
          %v347 = vmul.f32 %v310, %v326
          %v348 = vmul.f32 %v310, %v330
          %v349 = vmul.f32 %v310, %v334
          %v350 = vmul.f32 %v310, %v338
          %v351 = vmul.f32 %v315, %v326
          %v352 = vmul.f32 %v315, %v330
          %v353 = vmul.f32 %v315, %v334
          %v354 = vmul.f32 %v315, %v338
          %v355 = vmul.f32 %v320, %v326
          %v356 = vmul.f32 %v320, %v330
          %v357 = vmul.f32 %v320, %v334
          %v358 = vmul.f32 %v320, %v338
          %360 = vset.pattern.permute.xlu0 0
          %361 = vperm.xlu0 %360, %v282
          %v362 = vpop.permute.xlu0 %361
          %365 = vset.pattern.permute.xlu0 0
          %366 = vperm.xlu0 %365, %v283
          %v367 = vpop.permute.xlu0 %366
          %370 = vset.pattern.permute.xlu0 0
          %371 = vperm.xlu0 %370, %v284
          %v372 = vpop.permute.xlu0 %371
          %375 = vset.pattern.permute.xlu0 0
          %376 = vperm.xlu0 %375, %v285
          %v377 = vpop.permute.xlu0 %376
          %v379 = vadd.f32 %v343, %v362
          %v380 = vadd.f32 %v344, %v362
          %v381 = vadd.f32 %v345, %v362
          %v382 = vadd.f32 %v346, %v362
          %v383 = vadd.f32 %v347, %v367
          %v384 = vadd.f32 %v348, %v367
          %v385 = vadd.f32 %v349, %v367
          %v386 = vadd.f32 %v350, %v367
          %v387 = vadd.f32 %v351, %v372
          %v388 = vadd.f32 %v352, %v372
          %v389 = vadd.f32 %v353, %v372
          %v390 = vadd.f32 %v354, %v372
          %v391 = vadd.f32 %v355, %v377
          %v392 = vadd.f32 %v356, %v377
          %v393 = vadd.f32 %v357, %v377
          %v394 = vadd.f32 %v358, %v377
          %v395 = vtanh.pop %v379
          %v396 = vtanh.pop %v380
          %v397 = vtanh.pop %v381
          %v398 = vtanh.pop %v382
          %v399 = vtanh.pop %v383
          %v400 = vtanh.pop %v384
          %v401 = vtanh.pop %v385
          %v402 = vtanh.pop %v386
          %v403 = vtanh.pop %v387
          %v404 = vtanh.pop %v388
          %v405 = vtanh.pop %v389
          %v406 = vtanh.pop %v390
          %v407 = vtanh.pop %v391
          %v408 = vtanh.pop %v392
          %v409 = vtanh.pop %v393
          %v410 = vtanh.pop %v394
          %v411 = vld [vmem:[%s3] sm:$0xff]
          %v412 = vld [vmem:[%s3 + $0x8] sm:$0xff]
          %v413 = vld [vmem:[%s3 + $0x10] sm:$0xff]
          %v414 = vld [vmem:[%s3 + $0x18] sm:$0xff]
          %v415 = vld [vmem:[%s4] sm:$0xff]
          %v416 = vld [vmem:[%s4 + $0x8] sm:$0xff]
          %v417 = vld [vmem:[%s4 + $0x10] sm:$0xff]
          %v418 = vld [vmem:[%s4 + $0x18] sm:$0xff]
          %420 = vset.pattern.permute.xlu0 0
          %421 = vperm.xlu0 %420, %v415
          %v422 = vpop.permute.xlu0 %421
          %425 = vset.pattern.permute.xlu0 0
          %426 = vperm.xlu0 %425, %v416
          %v427 = vpop.permute.xlu0 %426
          %430 = vset.pattern.permute.xlu0 0
          %431 = vperm.xlu0 %430, %v417
          %v432 = vpop.permute.xlu0 %431
          %435 = vset.pattern.permute.xlu0 0
          %436 = vperm.xlu0 %435, %v418
          %v437 = vpop.permute.xlu0 %436
          %vm439 = vcmask 261120
          %v441 = vsel %vm439, %v411, 0
          %v444 = vsel %vm439, %v412, 0
          %v447 = vsel %vm439, %v413, 0
          %v450 = vsel %vm439, %v414, 0
          %452 = vmatprep.subr.mxu0 %v396
          %453 = vmatpush1.msra.mxu0 %v395
          %454 = vmatprep.subr.mxu0 %v400
          %455 = vmatpush1.msra.mxu0 %v399
          %456 = vmatprep.subr.mxu0 %v404
          %457 = vmatpush1.msra.mxu0 %v403
          %458 = vmatprep.subr.mxu0 %v408
          %459 = vmatpush1.msra.mxu0 %v407
          %460 = vmatprep.subr.mxu0 0.0
          %461 = vmatpush1.msra.mxu0 0.0
          %462 = vmatprep.subr.mxu0 0.0
          %463 = vmatpush1.msra.mxu0 0.0
          %464 = vmatprep.subr.mxu0 0.0
          %465 = vmatpush1.msra.mxu0 0.0
          %466 = vmatprep.subr.mxu0 0.0
          %467 = vmatpush1.msra.mxu0 0.0
          %468 = vmatprep.subr.mxu0 0.0
          %469 = vmatpush1.msra.mxu0 0.0
          %470 = vmatprep.subr.mxu0 0.0
          %471 = vmatpush1.msra.mxu0 0.0
          %472 = vmatprep.subr.mxu0 0.0
          %473 = vmatpush1.msra.mxu0 0.0
          %474 = vmatprep.subr.mxu0 0.0
          %475 = vmatpush1.msra.mxu0 0.0
          %476 = vmatprep.subr.mxu0 0.0
          %477 = vmatpush1.msra.mxu0 0.0
          %478 = vmatprep.subr.mxu0 0.0
          %479 = vmatpush1.msra.mxu0 0.0
          %480 = vmatprep.subr.mxu0 0.0
          %481 = vmatpush1.msra.mxu0 0.0
          %482 = vmatprep.subr.mxu0 0.0
          %483 = vmatpush1.msra.mxu0 0.0
          %484 = vmatprep.subr.mxu0 0.0
          %485 = vmatpush1.msra.mxu0 0.0
          %486 = vmatprep.subr.mxu0 0.0
          %487 = vmatpush1.msra.mxu0 0.0
          %488 = vmatprep.subr.mxu0 0.0
          %489 = vmatpush1.msra.mxu0 0.0
          %490 = vmatprep.subr.mxu0 0.0
          %491 = vmatpush1.msra.mxu0 0.0
          %492 = vmatprep.subr.mxu0 0.0
          %493 = vmatpush1.msra.mxu0 0.0
          %494 = vmatprep.subr.mxu0 0.0
          %495 = vmatpush1.msra.mxu0 0.0
          %496 = vmatprep.subr.mxu0 0.0
          %497 = vmatpush1.msra.mxu0 0.0
          %498 = vmatprep.subr.mxu0 0.0
          %499 = vmatpush1.msra.mxu0 0.0
          %500 = vmatprep.subr.mxu0 0.0
          %501 = vmatpush1.msra.mxu0 0.0
          %502 = vmatprep.subr.mxu0 0.0
          %503 = vmatpush1.msra.mxu0 0.0
          %504 = vmatprep.subr.mxu0 0.0
          %505 = vmatpush1.msra.mxu0 0.0
          %506 = vmatprep.subr.mxu0 0.0
          %507 = vmatpush1.msra.mxu0 0.0
          %508 = vmatprep.subr.mxu0 0.0
          %509 = vmatpush1.msra.mxu0 0.0
          %510 = vmatprep.subr.mxu0 0.0
          %511 = vmatpush1.msra.mxu0 0.0
          %512 = vmatprep.subr.mxu0 0.0
          %513 = vmatpush1.msra.mxu0 0.0
          %514 = vmatprep.subr.mxu0 0.0
          %515 = vmatpush1.msra.mxu0 0.0
          %516 = vmatprep.mubr.f32.mxu0 0.0
          %517 = vmatmul.mubr.f32.gmra.mrb[0].mxu0 %v441
          %v518 = vpop.f32.mrb[0].mxu0
          %v519 = vadd.f32 %v422, %v518
          %v520 = vpop.f32.mrb[0].mxu0
          %v521 = vadd.f32 %v422, %v520
          %522 = vmatprep.mubr.f32.mxu0 0.0
          %523 = vmatmul.mubr.f32.gmra.mrb[0].mxu0 %v444
          %v524 = vpop.f32.mrb[0].mxu0
          %v525 = vadd.f32 %v427, %v524
          %v526 = vpop.f32.mrb[0].mxu0
          %v527 = vadd.f32 %v427, %v526
          %528 = vmatprep.mubr.f32.mxu0 0.0
          %529 = vmatmul.mubr.f32.gmra.mrb[0].mxu0 %v447
          %v530 = vpop.f32.mrb[0].mxu0
          %v531 = vadd.f32 %v432, %v530
          %v532 = vpop.f32.mrb[0].mxu0
          %v533 = vadd.f32 %v432, %v532
          %534 = vmatprep.mubr.f32.mxu0 0.0
          %535 = vmatmul.mubr.f32.gmra.mrb[0].mxu0 %v450
          %v536 = vpop.f32.mrb[0].mxu0
          %v537 = vadd.f32 %v437, %v536
          %v538 = vpop.f32.mrb[0].mxu0
          %v539 = vadd.f32 %v437, %v538
          %540 = vdwg.mxu0
          %541 = vmatprep.subr.mxu0 %v398
          %542 = vmatpush1.msra.mxu0 %v397
          %543 = vmatprep.subr.mxu0 %v402
          %544 = vmatpush1.msra.mxu0 %v401
          %545 = vmatprep.subr.mxu0 %v406
          %546 = vmatpush1.msra.mxu0 %v405
          %547 = vmatprep.subr.mxu0 %v410
          %548 = vmatpush1.msra.mxu0 %v409
          %549 = vmatprep.subr.mxu0 0.0
          %550 = vmatpush1.msra.mxu0 0.0
          %551 = vmatprep.subr.mxu0 0.0
          %552 = vmatpush1.msra.mxu0 0.0
          %553 = vmatprep.subr.mxu0 0.0
          %554 = vmatpush1.msra.mxu0 0.0
          %555 = vmatprep.subr.mxu0 0.0
          %556 = vmatpush1.msra.mxu0 0.0
          %557 = vmatprep.subr.mxu0 0.0
          %558 = vmatpush1.msra.mxu0 0.0
          %559 = vmatprep.subr.mxu0 0.0
          %560 = vmatpush1.msra.mxu0 0.0
          %561 = vmatprep.subr.mxu0 0.0
          %562 = vmatpush1.msra.mxu0 0.0
          %563 = vmatprep.subr.mxu0 0.0
          %564 = vmatpush1.msra.mxu0 0.0
          %565 = vmatprep.subr.mxu0 0.0
          %566 = vmatpush1.msra.mxu0 0.0
          %567 = vmatprep.subr.mxu0 0.0
          %568 = vmatpush1.msra.mxu0 0.0
          %569 = vmatprep.subr.mxu0 0.0
          %570 = vmatpush1.msra.mxu0 0.0
          %571 = vmatprep.subr.mxu0 0.0
          %572 = vmatpush1.msra.mxu0 0.0
          %573 = vmatprep.subr.mxu0 0.0
          %574 = vmatpush1.msra.mxu0 0.0
          %575 = vmatprep.subr.mxu0 0.0
          %576 = vmatpush1.msra.mxu0 0.0
          %577 = vmatprep.subr.mxu0 0.0
          %578 = vmatpush1.msra.mxu0 0.0
          %579 = vmatprep.subr.mxu0 0.0
          %580 = vmatpush1.msra.mxu0 0.0
          %581 = vmatprep.subr.mxu0 0.0
          %582 = vmatpush1.msra.mxu0 0.0
          %583 = vmatprep.subr.mxu0 0.0
          %584 = vmatpush1.msra.mxu0 0.0
          %585 = vmatprep.subr.mxu0 0.0
          %586 = vmatpush1.msra.mxu0 0.0
          %587 = vmatprep.subr.mxu0 0.0
          %588 = vmatpush1.msra.mxu0 0.0
          %589 = vmatprep.subr.mxu0 0.0
          %590 = vmatpush1.msra.mxu0 0.0
          %591 = vmatprep.subr.mxu0 0.0
          %592 = vmatpush1.msra.mxu0 0.0
          %593 = vmatprep.subr.mxu0 0.0
          %594 = vmatpush1.msra.mxu0 0.0
          %595 = vmatprep.subr.mxu0 0.0
          %596 = vmatpush1.msra.mxu0 0.0
          %597 = vmatprep.subr.mxu0 0.0
          %598 = vmatpush1.msra.mxu0 0.0
          %599 = vmatprep.subr.mxu0 0.0
          %600 = vmatpush1.msra.mxu0 0.0
          %601 = vmatprep.subr.mxu0 0.0
          %602 = vmatpush1.msra.mxu0 0.0
          %603 = vmatprep.subr.mxu0 0.0
          %604 = vmatpush1.msra.mxu0 0.0
          %605 = vmatprep.mubr.f32.mxu0 0.0
          %606 = vmatmul.mubr.f32.gmra.mrb[0].mxu0 %v441
          %v607 = vpop.f32.mrb[0].mxu0
          %v608 = vadd.f32 %v422, %v607
          %v609 = vpop.f32.mrb[0].mxu0
          %v610 = vadd.f32 %v422, %v609
          %611 = vmatprep.mubr.f32.mxu0 0.0
          %612 = vmatmul.mubr.f32.gmra.mrb[0].mxu0 %v444
          %v613 = vpop.f32.mrb[0].mxu0
          %v614 = vadd.f32 %v427, %v613
          %v615 = vpop.f32.mrb[0].mxu0
          %v616 = vadd.f32 %v427, %v615
          %617 = vmatprep.mubr.f32.mxu0 0.0
          %618 = vmatmul.mubr.f32.gmra.mrb[0].mxu0 %v447
          %v619 = vpop.f32.mrb[0].mxu0
          %v620 = vadd.f32 %v432, %v619
          %v621 = vpop.f32.mrb[0].mxu0
          %v622 = vadd.f32 %v432, %v621
          %623 = vmatprep.mubr.f32.mxu0 0.0
          %624 = vmatmul.mubr.f32.gmra.mrb[0].mxu0 %v450
          %v625 = vpop.f32.mrb[0].mxu0
          %v626 = vadd.f32 %v437, %v625
          %v627 = vpop.f32.mrb[0].mxu0
          %v628 = vadd.f32 %v437, %v627
          %629 = vdwg.mxu0
          %v630 = vtanh.pop %v519
          %v631 = vtanh.pop %v521
          %v632 = vtanh.pop %v608
          %v633 = vtanh.pop %v610
          %v634 = vtanh.pop %v525
          %v635 = vtanh.pop %v527
          %v636 = vtanh.pop %v614
          %v637 = vtanh.pop %v616
          %v638 = vtanh.pop %v531
          %v639 = vtanh.pop %v533
          %v640 = vtanh.pop %v620
          %v641 = vtanh.pop %v622
          %v642 = vtanh.pop %v537
          %v643 = vtanh.pop %v539
          %v644 = vtanh.pop %v626
          %v645 = vtanh.pop %v628
          %s646 = scalar_lea.vmem %s3, 32
          %v647 = vld [vmem:[%s646] sm:$0xff]
          %v648 = vld [vmem:[%s646 + $0x8] sm:$0xff]
          %v649 = vld [vmem:[%s646 + $0x10] sm:$0xff]
          %v650 = vld [vmem:[%s646 + $0x18] sm:$0xff]
          %s651 = scalar_lea.vmem %s4, 32
          %v652 = vld [vmem:[%s651] sm:$0xff]
          %v653 = vld [vmem:[%s651 + $0x8] sm:$0xff]
          %v654 = vld [vmem:[%s651 + $0x10] sm:$0xff]
          %v655 = vld [vmem:[%s651 + $0x18] sm:$0xff]
          %657 = vset.pattern.permute.xlu0 0
          %658 = vperm.xlu0 %657, %v652
          %v659 = vpop.permute.xlu0 %658
          %662 = vset.pattern.permute.xlu0 0
          %663 = vperm.xlu0 %662, %v653
          %v664 = vpop.permute.xlu0 %663
          %667 = vset.pattern.permute.xlu0 0
          %668 = vperm.xlu0 %667, %v654
          %v669 = vpop.permute.xlu0 %668
          %672 = vset.pattern.permute.xlu0 0
          %673 = vperm.xlu0 %672, %v655
          %v674 = vpop.permute.xlu0 %673
          %v677 = vsel %vm439, %v647, 0
          %v680 = vsel %vm439, %v648, 0
          %v683 = vsel %vm439, %v649, 0
          %v686 = vsel %vm439, %v650, 0
          %688 = vmatprep.subr.mxu0 %v631
          %689 = vmatpush1.msra.mxu0 %v630
          %690 = vmatprep.subr.mxu0 %v635
          %691 = vmatpush1.msra.mxu0 %v634
          %692 = vmatprep.subr.mxu0 %v639
          %693 = vmatpush1.msra.mxu0 %v638
          %694 = vmatprep.subr.mxu0 %v643
          %695 = vmatpush1.msra.mxu0 %v642
          %696 = vmatprep.subr.mxu0 0.0
          %697 = vmatpush1.msra.mxu0 0.0
          %698 = vmatprep.subr.mxu0 0.0
          %699 = vmatpush1.msra.mxu0 0.0
          %700 = vmatprep.subr.mxu0 0.0
          %701 = vmatpush1.msra.mxu0 0.0
          %702 = vmatprep.subr.mxu0 0.0
          %703 = vmatpush1.msra.mxu0 0.0
          %704 = vmatprep.subr.mxu0 0.0
          %705 = vmatpush1.msra.mxu0 0.0
          %706 = vmatprep.subr.mxu0 0.0
          %707 = vmatpush1.msra.mxu0 0.0
          %708 = vmatprep.subr.mxu0 0.0
          %709 = vmatpush1.msra.mxu0 0.0
          %710 = vmatprep.subr.mxu0 0.0
          %711 = vmatpush1.msra.mxu0 0.0
          %712 = vmatprep.subr.mxu0 0.0
          %713 = vmatpush1.msra.mxu0 0.0
          %714 = vmatprep.subr.mxu0 0.0
          %715 = vmatpush1.msra.mxu0 0.0
          %716 = vmatprep.subr.mxu0 0.0
          %717 = vmatpush1.msra.mxu0 0.0
          %718 = vmatprep.subr.mxu0 0.0
          %719 = vmatpush1.msra.mxu0 0.0
          %720 = vmatprep.subr.mxu0 0.0
          %721 = vmatpush1.msra.mxu0 0.0
          %722 = vmatprep.subr.mxu0 0.0
          %723 = vmatpush1.msra.mxu0 0.0
          %724 = vmatprep.subr.mxu0 0.0
          %725 = vmatpush1.msra.mxu0 0.0
          %726 = vmatprep.subr.mxu0 0.0
          %727 = vmatpush1.msra.mxu0 0.0
          %728 = vmatprep.subr.mxu0 0.0
          %729 = vmatpush1.msra.mxu0 0.0
          %730 = vmatprep.subr.mxu0 0.0
          %731 = vmatpush1.msra.mxu0 0.0
          %732 = vmatprep.subr.mxu0 0.0
          %733 = vmatpush1.msra.mxu0 0.0
          %734 = vmatprep.subr.mxu0 0.0
          %735 = vmatpush1.msra.mxu0 0.0
          %736 = vmatprep.subr.mxu0 0.0
          %737 = vmatpush1.msra.mxu0 0.0
          %738 = vmatprep.subr.mxu0 0.0
          %739 = vmatpush1.msra.mxu0 0.0
          %740 = vmatprep.subr.mxu0 0.0
          %741 = vmatpush1.msra.mxu0 0.0
          %742 = vmatprep.subr.mxu0 0.0
          %743 = vmatpush1.msra.mxu0 0.0
          %744 = vmatprep.subr.mxu0 0.0
          %745 = vmatpush1.msra.mxu0 0.0
          %746 = vmatprep.subr.mxu0 0.0
          %747 = vmatpush1.msra.mxu0 0.0
          %748 = vmatprep.subr.mxu0 0.0
          %749 = vmatpush1.msra.mxu0 0.0
          %750 = vmatprep.subr.mxu0 0.0
          %751 = vmatpush1.msra.mxu0 0.0
          %752 = vmatprep.mubr.f32.mxu0 0.0
          %753 = vmatmul.mubr.f32.gmra.mrb[0].mxu0 %v677
          %v754 = vpop.f32.mrb[0].mxu0
          %v755 = vadd.f32 %v659, %v754
          %v756 = vpop.f32.mrb[0].mxu0
          %v757 = vadd.f32 %v659, %v756
          %758 = vmatprep.mubr.f32.mxu0 0.0
          %759 = vmatmul.mubr.f32.gmra.mrb[0].mxu0 %v680
          %v760 = vpop.f32.mrb[0].mxu0
          %v761 = vadd.f32 %v664, %v760
          %v762 = vpop.f32.mrb[0].mxu0
          %v763 = vadd.f32 %v664, %v762
          %764 = vmatprep.mubr.f32.mxu0 0.0
          %765 = vmatmul.mubr.f32.gmra.mrb[0].mxu0 %v683
          %v766 = vpop.f32.mrb[0].mxu0
          %v767 = vadd.f32 %v669, %v766
          %v768 = vpop.f32.mrb[0].mxu0
          %v769 = vadd.f32 %v669, %v768
          %770 = vmatprep.mubr.f32.mxu0 0.0
          %771 = vmatmul.mubr.f32.gmra.mrb[0].mxu0 %v686
          %v772 = vpop.f32.mrb[0].mxu0
          %v773 = vadd.f32 %v674, %v772
          %v774 = vpop.f32.mrb[0].mxu0
          %v775 = vadd.f32 %v674, %v774
          %776 = vdwg.mxu0
          %777 = vmatprep.subr.mxu0 %v633
          %778 = vmatpush1.msra.mxu0 %v632
          %779 = vmatprep.subr.mxu0 %v637
          %780 = vmatpush1.msra.mxu0 %v636
          %781 = vmatprep.subr.mxu0 %v641
          %782 = vmatpush1.msra.mxu0 %v640
          %783 = vmatprep.subr.mxu0 %v645
          %784 = vmatpush1.msra.mxu0 %v644
          %785 = vmatprep.subr.mxu0 0.0
          %786 = vmatpush1.msra.mxu0 0.0
          %787 = vmatprep.subr.mxu0 0.0
          %788 = vmatpush1.msra.mxu0 0.0
          %789 = vmatprep.subr.mxu0 0.0
          %790 = vmatpush1.msra.mxu0 0.0
          %791 = vmatprep.subr.mxu0 0.0
          %792 = vmatpush1.msra.mxu0 0.0
          %793 = vmatprep.subr.mxu0 0.0
          %794 = vmatpush1.msra.mxu0 0.0
          %795 = vmatprep.subr.mxu0 0.0
          %796 = vmatpush1.msra.mxu0 0.0
          %797 = vmatprep.subr.mxu0 0.0
          %798 = vmatpush1.msra.mxu0 0.0
          %799 = vmatprep.subr.mxu0 0.0
          %800 = vmatpush1.msra.mxu0 0.0
          %801 = vmatprep.subr.mxu0 0.0
          %802 = vmatpush1.msra.mxu0 0.0
          %803 = vmatprep.subr.mxu0 0.0
          %804 = vmatpush1.msra.mxu0 0.0
          %805 = vmatprep.subr.mxu0 0.0
          %806 = vmatpush1.msra.mxu0 0.0
          %807 = vmatprep.subr.mxu0 0.0
          %808 = vmatpush1.msra.mxu0 0.0
          %809 = vmatprep.subr.mxu0 0.0
          %810 = vmatpush1.msra.mxu0 0.0
          %811 = vmatprep.subr.mxu0 0.0
          %812 = vmatpush1.msra.mxu0 0.0
          %813 = vmatprep.subr.mxu0 0.0
          %814 = vmatpush1.msra.mxu0 0.0
          %815 = vmatprep.subr.mxu0 0.0
          %816 = vmatpush1.msra.mxu0 0.0
          %817 = vmatprep.subr.mxu0 0.0
          %818 = vmatpush1.msra.mxu0 0.0
          %819 = vmatprep.subr.mxu0 0.0
          %820 = vmatpush1.msra.mxu0 0.0
          %821 = vmatprep.subr.mxu0 0.0
          %822 = vmatpush1.msra.mxu0 0.0
          %823 = vmatprep.subr.mxu0 0.0
          %824 = vmatpush1.msra.mxu0 0.0
          %825 = vmatprep.subr.mxu0 0.0
          %826 = vmatpush1.msra.mxu0 0.0
          %827 = vmatprep.subr.mxu0 0.0
          %828 = vmatpush1.msra.mxu0 0.0
          %829 = vmatprep.subr.mxu0 0.0
          %830 = vmatpush1.msra.mxu0 0.0
          %831 = vmatprep.subr.mxu0 0.0
          %832 = vmatpush1.msra.mxu0 0.0
          %833 = vmatprep.subr.mxu0 0.0
          %834 = vmatpush1.msra.mxu0 0.0
          %835 = vmatprep.subr.mxu0 0.0
          %836 = vmatpush1.msra.mxu0 0.0
          %837 = vmatprep.subr.mxu0 0.0
          %838 = vmatpush1.msra.mxu0 0.0
          %839 = vmatprep.subr.mxu0 0.0
          %840 = vmatpush1.msra.mxu0 0.0
          %841 = vmatprep.mubr.f32.mxu0 0.0
          %842 = vmatmul.mubr.f32.gmra.mrb[0].mxu0 %v677
          %v843 = vpop.f32.mrb[0].mxu0
          %v844 = vadd.f32 %v659, %v843
          %v845 = vpop.f32.mrb[0].mxu0
          %v846 = vadd.f32 %v659, %v845
          %847 = vmatprep.mubr.f32.mxu0 0.0
          %848 = vmatmul.mubr.f32.gmra.mrb[0].mxu0 %v680
          %v849 = vpop.f32.mrb[0].mxu0
          %v850 = vadd.f32 %v664, %v849
          %v851 = vpop.f32.mrb[0].mxu0
          %v852 = vadd.f32 %v664, %v851
          %853 = vmatprep.mubr.f32.mxu0 0.0
          %854 = vmatmul.mubr.f32.gmra.mrb[0].mxu0 %v683
          %v855 = vpop.f32.mrb[0].mxu0
          %v856 = vadd.f32 %v669, %v855
          %v857 = vpop.f32.mrb[0].mxu0
          %v858 = vadd.f32 %v669, %v857
          %859 = vmatprep.mubr.f32.mxu0 0.0
          %860 = vmatmul.mubr.f32.gmra.mrb[0].mxu0 %v686
          %v861 = vpop.f32.mrb[0].mxu0
          %v862 = vadd.f32 %v674, %v861
          %v863 = vpop.f32.mrb[0].mxu0
          %v864 = vadd.f32 %v674, %v863
          %865 = vdwg.mxu0
          %v866 = vtanh.pop %v755
          %v867 = vtanh.pop %v757
          %v868 = vtanh.pop %v844
          %v869 = vtanh.pop %v846
          %v870 = vtanh.pop %v761
          %v871 = vtanh.pop %v763
          %v872 = vtanh.pop %v850
          %v873 = vtanh.pop %v852
          %v874 = vtanh.pop %v767
          %v875 = vtanh.pop %v769
          %v876 = vtanh.pop %v856
          %v877 = vtanh.pop %v858
          %v878 = vtanh.pop %v773
          %v879 = vtanh.pop %v775
          %v880 = vtanh.pop %v862
          %v881 = vtanh.pop %v864
          %s882 = scalar_lea.vmem %s3, 64
          %v883 = vld [vmem:[%s882] sm:$0xff]
          %v884 = vld [vmem:[%s882 + $0x8] sm:$0xff]
          %v885 = vld [vmem:[%s882 + $0x10] sm:$0xff]
          %v886 = vld [vmem:[%s882 + $0x18] sm:$0xff]
          %s887 = scalar_lea.vmem %s4, 64
          %v888 = vld [vmem:[%s887] sm:$0xff]
          %v889 = vld [vmem:[%s887 + $0x8] sm:$0xff]
          %v890 = vld [vmem:[%s887 + $0x10] sm:$0xff]
          %v891 = vld [vmem:[%s887 + $0x18] sm:$0xff]
          %893 = vset.pattern.permute.xlu0 0
          %894 = vperm.xlu0 %893, %v888
          %v895 = vpop.permute.xlu0 %894
          %898 = vset.pattern.permute.xlu0 0
          %899 = vperm.xlu0 %898, %v889
          %v900 = vpop.permute.xlu0 %899
          %903 = vset.pattern.permute.xlu0 0
          %904 = vperm.xlu0 %903, %v890
          %v905 = vpop.permute.xlu0 %904
          %908 = vset.pattern.permute.xlu0 0
          %909 = vperm.xlu0 %908, %v891
          %v910 = vpop.permute.xlu0 %909
          %v913 = vsel %vm439, %v883, 0
          %v916 = vsel %vm439, %v884, 0
          %v919 = vsel %vm439, %v885, 0
          %v922 = vsel %vm439, %v886, 0
          %924 = vmatprep.subr.mxu0 %v867
          %925 = vmatpush1.msra.mxu0 %v866
          %926 = vmatprep.subr.mxu0 %v871
          %927 = vmatpush1.msra.mxu0 %v870
          %928 = vmatprep.subr.mxu0 %v875
          %929 = vmatpush1.msra.mxu0 %v874
          %930 = vmatprep.subr.mxu0 %v879
          %931 = vmatpush1.msra.mxu0 %v878
          %932 = vmatprep.subr.mxu0 0.0
          %933 = vmatpush1.msra.mxu0 0.0
          %934 = vmatprep.subr.mxu0 0.0
          %935 = vmatpush1.msra.mxu0 0.0
          %936 = vmatprep.subr.mxu0 0.0
          %937 = vmatpush1.msra.mxu0 0.0
          %938 = vmatprep.subr.mxu0 0.0
          %939 = vmatpush1.msra.mxu0 0.0
          %940 = vmatprep.subr.mxu0 0.0
          %941 = vmatpush1.msra.mxu0 0.0
          %942 = vmatprep.subr.mxu0 0.0
          %943 = vmatpush1.msra.mxu0 0.0
          %944 = vmatprep.subr.mxu0 0.0
          %945 = vmatpush1.msra.mxu0 0.0
          %946 = vmatprep.subr.mxu0 0.0
          %947 = vmatpush1.msra.mxu0 0.0
          %948 = vmatprep.subr.mxu0 0.0
          %949 = vmatpush1.msra.mxu0 0.0
          %950 = vmatprep.subr.mxu0 0.0
          %951 = vmatpush1.msra.mxu0 0.0
          %952 = vmatprep.subr.mxu0 0.0
          %953 = vmatpush1.msra.mxu0 0.0
          %954 = vmatprep.subr.mxu0 0.0
          %955 = vmatpush1.msra.mxu0 0.0
          %956 = vmatprep.subr.mxu0 0.0
          %957 = vmatpush1.msra.mxu0 0.0
          %958 = vmatprep.subr.mxu0 0.0
          %959 = vmatpush1.msra.mxu0 0.0
          %960 = vmatprep.subr.mxu0 0.0
          %961 = vmatpush1.msra.mxu0 0.0
          %962 = vmatprep.subr.mxu0 0.0
          %963 = vmatpush1.msra.mxu0 0.0
          %964 = vmatprep.subr.mxu0 0.0
          %965 = vmatpush1.msra.mxu0 0.0
          %966 = vmatprep.subr.mxu0 0.0
          %967 = vmatpush1.msra.mxu0 0.0
          %968 = vmatprep.subr.mxu0 0.0
          %969 = vmatpush1.msra.mxu0 0.0
          %970 = vmatprep.subr.mxu0 0.0
          %971 = vmatpush1.msra.mxu0 0.0
          %972 = vmatprep.subr.mxu0 0.0
          %973 = vmatpush1.msra.mxu0 0.0
          %974 = vmatprep.subr.mxu0 0.0
          %975 = vmatpush1.msra.mxu0 0.0
          %976 = vmatprep.subr.mxu0 0.0
          %977 = vmatpush1.msra.mxu0 0.0
          %978 = vmatprep.subr.mxu0 0.0
          %979 = vmatpush1.msra.mxu0 0.0
          %980 = vmatprep.subr.mxu0 0.0
          %981 = vmatpush1.msra.mxu0 0.0
          %982 = vmatprep.subr.mxu0 0.0
          %983 = vmatpush1.msra.mxu0 0.0
          %984 = vmatprep.subr.mxu0 0.0
          %985 = vmatpush1.msra.mxu0 0.0
          %986 = vmatprep.subr.mxu0 0.0
          %987 = vmatpush1.msra.mxu0 0.0
          %988 = vmatprep.mubr.f32.mxu0 0.0
          %989 = vmatmul.mubr.f32.gmra.mrb[0].mxu0 %v913
          %v990 = vpop.f32.mrb[0].mxu0
          %v991 = vadd.f32 %v895, %v990
          %v992 = vpop.f32.mrb[0].mxu0
          %v993 = vadd.f32 %v895, %v992
          %994 = vmatprep.mubr.f32.mxu0 0.0
          %995 = vmatmul.mubr.f32.gmra.mrb[0].mxu0 %v916
          %v996 = vpop.f32.mrb[0].mxu0
          %v997 = vadd.f32 %v900, %v996
          %v998 = vpop.f32.mrb[0].mxu0
          %v999 = vadd.f32 %v900, %v998
          %1000 = vmatprep.mubr.f32.mxu0 0.0
          %1001 = vmatmul.mubr.f32.gmra.mrb[0].mxu0 %v919
          %v1002 = vpop.f32.mrb[0].mxu0
          %v1003 = vadd.f32 %v905, %v1002
          %v1004 = vpop.f32.mrb[0].mxu0
          %v1005 = vadd.f32 %v905, %v1004
          %1006 = vmatprep.mubr.f32.mxu0 0.0
          %1007 = vmatmul.mubr.f32.gmra.mrb[0].mxu0 %v922
          %v1008 = vpop.f32.mrb[0].mxu0
          %v1009 = vadd.f32 %v910, %v1008
          %v1010 = vpop.f32.mrb[0].mxu0
          %v1011 = vadd.f32 %v910, %v1010
          %1012 = vdwg.mxu0
          %1013 = vmatprep.subr.mxu0 %v869
          %1014 = vmatpush1.msra.mxu0 %v868
          %1015 = vmatprep.subr.mxu0 %v873
          %1016 = vmatpush1.msra.mxu0 %v872
          %1017 = vmatprep.subr.mxu0 %v877
          %1018 = vmatpush1.msra.mxu0 %v876
          %1019 = vmatprep.subr.mxu0 %v881
          %1020 = vmatpush1.msra.mxu0 %v880
          %1021 = vmatprep.subr.mxu0 0.0
          %1022 = vmatpush1.msra.mxu0 0.0
          %1023 = vmatprep.subr.mxu0 0.0
          %1024 = vmatpush1.msra.mxu0 0.0
          %1025 = vmatprep.subr.mxu0 0.0
          %1026 = vmatpush1.msra.mxu0 0.0
          %1027 = vmatprep.subr.mxu0 0.0
          %1028 = vmatpush1.msra.mxu0 0.0
          %1029 = vmatprep.subr.mxu0 0.0
          %1030 = vmatpush1.msra.mxu0 0.0
          %1031 = vmatprep.subr.mxu0 0.0
          %1032 = vmatpush1.msra.mxu0 0.0
          %1033 = vmatprep.subr.mxu0 0.0
          %1034 = vmatpush1.msra.mxu0 0.0
          %1035 = vmatprep.subr.mxu0 0.0
          %1036 = vmatpush1.msra.mxu0 0.0
          %1037 = vmatprep.subr.mxu0 0.0
          %1038 = vmatpush1.msra.mxu0 0.0
          %1039 = vmatprep.subr.mxu0 0.0
          %1040 = vmatpush1.msra.mxu0 0.0
          %1041 = vmatprep.subr.mxu0 0.0
          %1042 = vmatpush1.msra.mxu0 0.0
          %1043 = vmatprep.subr.mxu0 0.0
          %1044 = vmatpush1.msra.mxu0 0.0
          %1045 = vmatprep.subr.mxu0 0.0
          %1046 = vmatpush1.msra.mxu0 0.0
          %1047 = vmatprep.subr.mxu0 0.0
          %1048 = vmatpush1.msra.mxu0 0.0
          %1049 = vmatprep.subr.mxu0 0.0
          %1050 = vmatpush1.msra.mxu0 0.0
          %1051 = vmatprep.subr.mxu0 0.0
          %1052 = vmatpush1.msra.mxu0 0.0
          %1053 = vmatprep.subr.mxu0 0.0
          %1054 = vmatpush1.msra.mxu0 0.0
          %1055 = vmatprep.subr.mxu0 0.0
          %1056 = vmatpush1.msra.mxu0 0.0
          %1057 = vmatprep.subr.mxu0 0.0
          %1058 = vmatpush1.msra.mxu0 0.0
          %1059 = vmatprep.subr.mxu0 0.0
          %1060 = vmatpush1.msra.mxu0 0.0
          %1061 = vmatprep.subr.mxu0 0.0
          %1062 = vmatpush1.msra.mxu0 0.0
          %1063 = vmatprep.subr.mxu0 0.0
          %1064 = vmatpush1.msra.mxu0 0.0
          %1065 = vmatprep.subr.mxu0 0.0
          %1066 = vmatpush1.msra.mxu0 0.0
          %1067 = vmatprep.subr.mxu0 0.0
          %1068 = vmatpush1.msra.mxu0 0.0
          %1069 = vmatprep.subr.mxu0 0.0
          %1070 = vmatpush1.msra.mxu0 0.0
          %1071 = vmatprep.subr.mxu0 0.0
          %1072 = vmatpush1.msra.mxu0 0.0
          %1073 = vmatprep.subr.mxu0 0.0
          %1074 = vmatpush1.msra.mxu0 0.0
          %1075 = vmatprep.subr.mxu0 0.0
          %1076 = vmatpush1.msra.mxu0 0.0
          %1077 = vmatprep.mubr.f32.mxu0 0.0
          %1078 = vmatmul.mubr.f32.gmra.mrb[0].mxu0 %v913
          %v1079 = vpop.f32.mrb[0].mxu0
          %v1080 = vadd.f32 %v895, %v1079
          %v1081 = vpop.f32.mrb[0].mxu0
          %v1082 = vadd.f32 %v895, %v1081
          %1083 = vmatprep.mubr.f32.mxu0 0.0
          %1084 = vmatmul.mubr.f32.gmra.mrb[0].mxu0 %v916
          %v1085 = vpop.f32.mrb[0].mxu0
          %v1086 = vadd.f32 %v900, %v1085
          %v1087 = vpop.f32.mrb[0].mxu0
          %v1088 = vadd.f32 %v900, %v1087
          %1089 = vmatprep.mubr.f32.mxu0 0.0
          %1090 = vmatmul.mubr.f32.gmra.mrb[0].mxu0 %v919
          %v1091 = vpop.f32.mrb[0].mxu0
          %v1092 = vadd.f32 %v905, %v1091
          %v1093 = vpop.f32.mrb[0].mxu0
          %v1094 = vadd.f32 %v905, %v1093
          %1095 = vmatprep.mubr.f32.mxu0 0.0
          %1096 = vmatmul.mubr.f32.gmra.mrb[0].mxu0 %v922
          %v1097 = vpop.f32.mrb[0].mxu0
          %v1098 = vadd.f32 %v910, %v1097
          %v1099 = vpop.f32.mrb[0].mxu0
          %v1100 = vadd.f32 %v910, %v1099
          %1101 = vdwg.mxu0
          %v1102 = vtanh.pop %v991
          %v1103 = vtanh.pop %v993
          %v1104 = vtanh.pop %v1080
          %v1105 = vtanh.pop %v1082
          %v1106 = vtanh.pop %v997
          %v1107 = vtanh.pop %v999
          %v1108 = vtanh.pop %v1086
          %v1109 = vtanh.pop %v1088
          %v1110 = vtanh.pop %v1003
          %v1111 = vtanh.pop %v1005
          %v1112 = vtanh.pop %v1092
          %v1113 = vtanh.pop %v1094
          %v1114 = vtanh.pop %v1009
          %v1115 = vtanh.pop %v1011
          %v1116 = vtanh.pop %v1098
          %v1117 = vtanh.pop %v1100
          %s1118 = scalar_lea.vmem %s3, 96
          %v1119 = vld [vmem:[%s1118] sm:$0xff]
          %v1120 = vld [vmem:[%s1118 + $0x8] sm:$0xff]
          %v1121 = vld [vmem:[%s1118 + $0x10] sm:$0xff]
          %v1122 = vld [vmem:[%s1118 + $0x18] sm:$0xff]
          %s1123 = scalar_lea.vmem %s4, 96
          %v1124 = vld [vmem:[%s1123] sm:$0xff]
          %v1125 = vld [vmem:[%s1123 + $0x8] sm:$0xff]
          %v1126 = vld [vmem:[%s1123 + $0x10] sm:$0xff]
          %v1127 = vld [vmem:[%s1123 + $0x18] sm:$0xff]
          %1129 = vset.pattern.permute.xlu0 0
          %1130 = vperm.xlu0 %1129, %v1124
          %v1131 = vpop.permute.xlu0 %1130
          %1134 = vset.pattern.permute.xlu0 0
          %1135 = vperm.xlu0 %1134, %v1125
          %v1136 = vpop.permute.xlu0 %1135
          %1139 = vset.pattern.permute.xlu0 0
          %1140 = vperm.xlu0 %1139, %v1126
          %v1141 = vpop.permute.xlu0 %1140
          %1144 = vset.pattern.permute.xlu0 0
          %1145 = vperm.xlu0 %1144, %v1127
          %v1146 = vpop.permute.xlu0 %1145
          %v1149 = vsel %vm439, %v1119, 0
          %v1152 = vsel %vm439, %v1120, 0
          %v1155 = vsel %vm439, %v1121, 0
          %v1158 = vsel %vm439, %v1122, 0
          %1160 = vmatprep.subr.mxu0 %v1103
          %1161 = vmatpush1.msra.mxu0 %v1102
          %1162 = vmatprep.subr.mxu0 %v1107
          %1163 = vmatpush1.msra.mxu0 %v1106
          %1164 = vmatprep.subr.mxu0 %v1111
          %1165 = vmatpush1.msra.mxu0 %v1110
          %1166 = vmatprep.subr.mxu0 %v1115
          %1167 = vmatpush1.msra.mxu0 %v1114
          %1168 = vmatprep.subr.mxu0 0.0
          %1169 = vmatpush1.msra.mxu0 0.0
          %1170 = vmatprep.subr.mxu0 0.0
          %1171 = vmatpush1.msra.mxu0 0.0
          %1172 = vmatprep.subr.mxu0 0.0
          %1173 = vmatpush1.msra.mxu0 0.0
          %1174 = vmatprep.subr.mxu0 0.0
          %1175 = vmatpush1.msra.mxu0 0.0
          %1176 = vmatprep.subr.mxu0 0.0
          %1177 = vmatpush1.msra.mxu0 0.0
          %1178 = vmatprep.subr.mxu0 0.0
          %1179 = vmatpush1.msra.mxu0 0.0
          %1180 = vmatprep.subr.mxu0 0.0
          %1181 = vmatpush1.msra.mxu0 0.0
          %1182 = vmatprep.subr.mxu0 0.0
          %1183 = vmatpush1.msra.mxu0 0.0
          %1184 = vmatprep.subr.mxu0 0.0
          %1185 = vmatpush1.msra.mxu0 0.0
          %1186 = vmatprep.subr.mxu0 0.0
          %1187 = vmatpush1.msra.mxu0 0.0
          %1188 = vmatprep.subr.mxu0 0.0
          %1189 = vmatpush1.msra.mxu0 0.0
          %1190 = vmatprep.subr.mxu0 0.0
          %1191 = vmatpush1.msra.mxu0 0.0
          %1192 = vmatprep.subr.mxu0 0.0
          %1193 = vmatpush1.msra.mxu0 0.0
          %1194 = vmatprep.subr.mxu0 0.0
          %1195 = vmatpush1.msra.mxu0 0.0
          %1196 = vmatprep.subr.mxu0 0.0
          %1197 = vmatpush1.msra.mxu0 0.0
          %1198 = vmatprep.subr.mxu0 0.0
          %1199 = vmatpush1.msra.mxu0 0.0
          %1200 = vmatprep.subr.mxu0 0.0
          %1201 = vmatpush1.msra.mxu0 0.0
          %1202 = vmatprep.subr.mxu0 0.0
          %1203 = vmatpush1.msra.mxu0 0.0
          %1204 = vmatprep.subr.mxu0 0.0
          %1205 = vmatpush1.msra.mxu0 0.0
          %1206 = vmatprep.subr.mxu0 0.0
          %1207 = vmatpush1.msra.mxu0 0.0
          %1208 = vmatprep.subr.mxu0 0.0
          %1209 = vmatpush1.msra.mxu0 0.0
          %1210 = vmatprep.subr.mxu0 0.0
          %1211 = vmatpush1.msra.mxu0 0.0
          %1212 = vmatprep.subr.mxu0 0.0
          %1213 = vmatpush1.msra.mxu0 0.0
          %1214 = vmatprep.subr.mxu0 0.0
          %1215 = vmatpush1.msra.mxu0 0.0
          %1216 = vmatprep.subr.mxu0 0.0
          %1217 = vmatpush1.msra.mxu0 0.0
          %1218 = vmatprep.subr.mxu0 0.0
          %1219 = vmatpush1.msra.mxu0 0.0
          %1220 = vmatprep.subr.mxu0 0.0
          %1221 = vmatpush1.msra.mxu0 0.0
          %1222 = vmatprep.subr.mxu0 0.0
          %1223 = vmatpush1.msra.mxu0 0.0
          %1224 = vmatprep.mubr.f32.mxu0 0.0
          %1225 = vmatmul.mubr.f32.gmra.mrb[0].mxu0 %v1149
          %v1226 = vpop.f32.mrb[0].mxu0
          %v1227 = vadd.f32 %v1131, %v1226
          %v1228 = vpop.f32.mrb[0].mxu0
          %v1229 = vadd.f32 %v1131, %v1228
          %1230 = vmatprep.mubr.f32.mxu0 0.0
          %1231 = vmatmul.mubr.f32.gmra.mrb[0].mxu0 %v1152
          %v1232 = vpop.f32.mrb[0].mxu0
          %v1233 = vadd.f32 %v1136, %v1232
          %v1234 = vpop.f32.mrb[0].mxu0
          %v1235 = vadd.f32 %v1136, %v1234
          %1236 = vmatprep.mubr.f32.mxu0 0.0
          %1237 = vmatmul.mubr.f32.gmra.mrb[0].mxu0 %v1155
          %v1238 = vpop.f32.mrb[0].mxu0
          %v1239 = vadd.f32 %v1141, %v1238
          %v1240 = vpop.f32.mrb[0].mxu0
          %v1241 = vadd.f32 %v1141, %v1240
          %1242 = vmatprep.mubr.f32.mxu0 0.0
          %1243 = vmatmul.mubr.f32.gmra.mrb[0].mxu0 %v1158
          %v1244 = vpop.f32.mrb[0].mxu0
          %v1245 = vadd.f32 %v1146, %v1244
          %v1246 = vpop.f32.mrb[0].mxu0
          %v1247 = vadd.f32 %v1146, %v1246
          %1248 = vdwg.mxu0
          %1249 = vmatprep.subr.mxu0 %v1105
          %1250 = vmatpush1.msra.mxu0 %v1104
          %1251 = vmatprep.subr.mxu0 %v1109
          %1252 = vmatpush1.msra.mxu0 %v1108
          %1253 = vmatprep.subr.mxu0 %v1113
          %1254 = vmatpush1.msra.mxu0 %v1112
          %1255 = vmatprep.subr.mxu0 %v1117
          %1256 = vmatpush1.msra.mxu0 %v1116
          %1257 = vmatprep.subr.mxu0 0.0
          %1258 = vmatpush1.msra.mxu0 0.0
          %1259 = vmatprep.subr.mxu0 0.0
          %1260 = vmatpush1.msra.mxu0 0.0
          %1261 = vmatprep.subr.mxu0 0.0
          %1262 = vmatpush1.msra.mxu0 0.0
          %1263 = vmatprep.subr.mxu0 0.0
          %1264 = vmatpush1.msra.mxu0 0.0
          %1265 = vmatprep.subr.mxu0 0.0
          %1266 = vmatpush1.msra.mxu0 0.0
          %1267 = vmatprep.subr.mxu0 0.0
          %1268 = vmatpush1.msra.mxu0 0.0
          %1269 = vmatprep.subr.mxu0 0.0
          %1270 = vmatpush1.msra.mxu0 0.0
          %1271 = vmatprep.subr.mxu0 0.0
          %1272 = vmatpush1.msra.mxu0 0.0
          %1273 = vmatprep.subr.mxu0 0.0
          %1274 = vmatpush1.msra.mxu0 0.0
          %1275 = vmatprep.subr.mxu0 0.0
          %1276 = vmatpush1.msra.mxu0 0.0
          %1277 = vmatprep.subr.mxu0 0.0
          %1278 = vmatpush1.msra.mxu0 0.0
          %1279 = vmatprep.subr.mxu0 0.0
          %1280 = vmatpush1.msra.mxu0 0.0
          %1281 = vmatprep.subr.mxu0 0.0
          %1282 = vmatpush1.msra.mxu0 0.0
          %1283 = vmatprep.subr.mxu0 0.0
          %1284 = vmatpush1.msra.mxu0 0.0
          %1285 = vmatprep.subr.mxu0 0.0
          %1286 = vmatpush1.msra.mxu0 0.0
          %1287 = vmatprep.subr.mxu0 0.0
          %1288 = vmatpush1.msra.mxu0 0.0
          %1289 = vmatprep.subr.mxu0 0.0
          %1290 = vmatpush1.msra.mxu0 0.0
          %1291 = vmatprep.subr.mxu0 0.0
          %1292 = vmatpush1.msra.mxu0 0.0
          %1293 = vmatprep.subr.mxu0 0.0
          %1294 = vmatpush1.msra.mxu0 0.0
          %1295 = vmatprep.subr.mxu0 0.0
          %1296 = vmatpush1.msra.mxu0 0.0
          %1297 = vmatprep.subr.mxu0 0.0
          %1298 = vmatpush1.msra.mxu0 0.0
          %1299 = vmatprep.subr.mxu0 0.0
          %1300 = vmatpush1.msra.mxu0 0.0
          %1301 = vmatprep.subr.mxu0 0.0
          %1302 = vmatpush1.msra.mxu0 0.0
          %1303 = vmatprep.subr.mxu0 0.0
          %1304 = vmatpush1.msra.mxu0 0.0
          %1305 = vmatprep.subr.mxu0 0.0
          %1306 = vmatpush1.msra.mxu0 0.0
          %1307 = vmatprep.subr.mxu0 0.0
          %1308 = vmatpush1.msra.mxu0 0.0
          %1309 = vmatprep.subr.mxu0 0.0
          %1310 = vmatpush1.msra.mxu0 0.0
          %1311 = vmatprep.subr.mxu0 0.0
          %1312 = vmatpush1.msra.mxu0 0.0
          %1313 = vmatprep.mubr.f32.mxu0 0.0
          %1314 = vmatmul.mubr.f32.gmra.mrb[0].mxu0 %v1149
          %v1315 = vpop.f32.mrb[0].mxu0
          %v1316 = vadd.f32 %v1131, %v1315
          %v1317 = vpop.f32.mrb[0].mxu0
          %v1318 = vadd.f32 %v1131, %v1317
          %1319 = vmatprep.mubr.f32.mxu0 0.0
          %1320 = vmatmul.mubr.f32.gmra.mrb[0].mxu0 %v1152
          %v1321 = vpop.f32.mrb[0].mxu0
          %v1322 = vadd.f32 %v1136, %v1321
          %v1323 = vpop.f32.mrb[0].mxu0
          %v1324 = vadd.f32 %v1136, %v1323
          %1325 = vmatprep.mubr.f32.mxu0 0.0
          %1326 = vmatmul.mubr.f32.gmra.mrb[0].mxu0 %v1155
          %v1327 = vpop.f32.mrb[0].mxu0
          %v1328 = vadd.f32 %v1141, %v1327
          %v1329 = vpop.f32.mrb[0].mxu0
          %v1330 = vadd.f32 %v1141, %v1329
          %1331 = vmatprep.mubr.f32.mxu0 0.0
          %1332 = vmatmul.mubr.f32.gmra.mrb[0].mxu0 %v1158
          %v1333 = vpop.f32.mrb[0].mxu0
          %v1334 = vadd.f32 %v1146, %v1333
          %v1335 = vpop.f32.mrb[0].mxu0
          %v1336 = vadd.f32 %v1146, %v1335
          %1337 = vdwg.mxu0
          %v1338 = vtanh.pop %v1227
          %v1339 = vtanh.pop %v1229
          %v1340 = vtanh.pop %v1316
          %v1341 = vtanh.pop %v1318
          %v1342 = vtanh.pop %v1233
          %v1343 = vtanh.pop %v1235
          %v1344 = vtanh.pop %v1322
          %v1345 = vtanh.pop %v1324
          %v1346 = vtanh.pop %v1239
          %v1347 = vtanh.pop %v1241
          %v1348 = vtanh.pop %v1328
          %v1349 = vtanh.pop %v1330
          %v1350 = vtanh.pop %v1245
          %v1351 = vtanh.pop %v1247
          %v1352 = vtanh.pop %v1334
          %v1353 = vtanh.pop %v1336
          %s1354 = scalar_lea.vmem %s3, 128
          %v1355 = vld [vmem:[%s1354] sm:$0xff]
          %v1356 = vld [vmem:[%s1354 + $0x8] sm:$0xff]
          %v1357 = vld [vmem:[%s1354 + $0x10] sm:$0xff]
          %v1358 = vld [vmem:[%s1354 + $0x18] sm:$0xff]
          %s1359 = scalar_lea.vmem %s4, 128
          %v1360 = vld [vmem:[%s1359] sm:$0xff]
          %v1361 = vld [vmem:[%s1359 + $0x8] sm:$0xff]
          %v1362 = vld [vmem:[%s1359 + $0x10] sm:$0xff]
          %v1363 = vld [vmem:[%s1359 + $0x18] sm:$0xff]
          %1365 = vset.pattern.permute.xlu0 0
          %1366 = vperm.xlu0 %1365, %v1360
          %v1367 = vpop.permute.xlu0 %1366
          %1370 = vset.pattern.permute.xlu0 0
          %1371 = vperm.xlu0 %1370, %v1361
          %v1372 = vpop.permute.xlu0 %1371
          %1375 = vset.pattern.permute.xlu0 0
          %1376 = vperm.xlu0 %1375, %v1362
          %v1377 = vpop.permute.xlu0 %1376
          %1380 = vset.pattern.permute.xlu0 0
          %1381 = vperm.xlu0 %1380, %v1363
          %v1382 = vpop.permute.xlu0 %1381
          %v1385 = vsel %vm439, %v1355, 0
          %v1388 = vsel %vm439, %v1356, 0
          %v1391 = vsel %vm439, %v1357, 0
          %v1394 = vsel %vm439, %v1358, 0
          %1396 = vmatprep.subr.mxu0 %v1339
          %1397 = vmatpush1.msra.mxu0 %v1338
          %1398 = vmatprep.subr.mxu0 %v1343
          %1399 = vmatpush1.msra.mxu0 %v1342
          %1400 = vmatprep.subr.mxu0 %v1347
          %1401 = vmatpush1.msra.mxu0 %v1346
          %1402 = vmatprep.subr.mxu0 %v1351
          %1403 = vmatpush1.msra.mxu0 %v1350
          %1404 = vmatprep.subr.mxu0 0.0
          %1405 = vmatpush1.msra.mxu0 0.0
          %1406 = vmatprep.subr.mxu0 0.0
          %1407 = vmatpush1.msra.mxu0 0.0
          %1408 = vmatprep.subr.mxu0 0.0
          %1409 = vmatpush1.msra.mxu0 0.0
          %1410 = vmatprep.subr.mxu0 0.0
          %1411 = vmatpush1.msra.mxu0 0.0
          %1412 = vmatprep.subr.mxu0 0.0
          %1413 = vmatpush1.msra.mxu0 0.0
          %1414 = vmatprep.subr.mxu0 0.0
          %1415 = vmatpush1.msra.mxu0 0.0
          %1416 = vmatprep.subr.mxu0 0.0
          %1417 = vmatpush1.msra.mxu0 0.0
          %1418 = vmatprep.subr.mxu0 0.0
          %1419 = vmatpush1.msra.mxu0 0.0
          %1420 = vmatprep.subr.mxu0 0.0
          %1421 = vmatpush1.msra.mxu0 0.0
          %1422 = vmatprep.subr.mxu0 0.0
          %1423 = vmatpush1.msra.mxu0 0.0
          %1424 = vmatprep.subr.mxu0 0.0
          %1425 = vmatpush1.msra.mxu0 0.0
          %1426 = vmatprep.subr.mxu0 0.0
          %1427 = vmatpush1.msra.mxu0 0.0
          %1428 = vmatprep.subr.mxu0 0.0
          %1429 = vmatpush1.msra.mxu0 0.0
          %1430 = vmatprep.subr.mxu0 0.0
          %1431 = vmatpush1.msra.mxu0 0.0
          %1432 = vmatprep.subr.mxu0 0.0
          %1433 = vmatpush1.msra.mxu0 0.0
          %1434 = vmatprep.subr.mxu0 0.0
          %1435 = vmatpush1.msra.mxu0 0.0
          %1436 = vmatprep.subr.mxu0 0.0
          %1437 = vmatpush1.msra.mxu0 0.0
          %1438 = vmatprep.subr.mxu0 0.0
          %1439 = vmatpush1.msra.mxu0 0.0
          %1440 = vmatprep.subr.mxu0 0.0
          %1441 = vmatpush1.msra.mxu0 0.0
          %1442 = vmatprep.subr.mxu0 0.0
          %1443 = vmatpush1.msra.mxu0 0.0
          %1444 = vmatprep.subr.mxu0 0.0
          %1445 = vmatpush1.msra.mxu0 0.0
          %1446 = vmatprep.subr.mxu0 0.0
          %1447 = vmatpush1.msra.mxu0 0.0
          %1448 = vmatprep.subr.mxu0 0.0
          %1449 = vmatpush1.msra.mxu0 0.0
          %1450 = vmatprep.subr.mxu0 0.0
          %1451 = vmatpush1.msra.mxu0 0.0
          %1452 = vmatprep.subr.mxu0 0.0
          %1453 = vmatpush1.msra.mxu0 0.0
          %1454 = vmatprep.subr.mxu0 0.0
          %1455 = vmatpush1.msra.mxu0 0.0
          %1456 = vmatprep.subr.mxu0 0.0
          %1457 = vmatpush1.msra.mxu0 0.0
          %1458 = vmatprep.subr.mxu0 0.0
          %1459 = vmatpush1.msra.mxu0 0.0
          %1460 = vmatprep.mubr.f32.mxu0 0.0
          %1461 = vmatmul.mubr.f32.gmra.mrb[0].mxu0 %v1385
          %v1462 = vpop.f32.mrb[0].mxu0
          %v1463 = vadd.f32 %v1367, %v1462
          %v1464 = vpop.f32.mrb[0].mxu0
          %v1465 = vadd.f32 %v1367, %v1464
          %1466 = vmatprep.mubr.f32.mxu0 0.0
          %1467 = vmatmul.mubr.f32.gmra.mrb[0].mxu0 %v1388
          %v1468 = vpop.f32.mrb[0].mxu0
          %v1469 = vadd.f32 %v1372, %v1468
          %v1470 = vpop.f32.mrb[0].mxu0
          %v1471 = vadd.f32 %v1372, %v1470
          %1472 = vmatprep.mubr.f32.mxu0 0.0
          %1473 = vmatmul.mubr.f32.gmra.mrb[0].mxu0 %v1391
          %v1474 = vpop.f32.mrb[0].mxu0
          %v1475 = vadd.f32 %v1377, %v1474
          %v1476 = vpop.f32.mrb[0].mxu0
          %v1477 = vadd.f32 %v1377, %v1476
          %1478 = vmatprep.mubr.f32.mxu0 0.0
          %1479 = vmatmul.mubr.f32.gmra.mrb[0].mxu0 %v1394
          %v1480 = vpop.f32.mrb[0].mxu0
          %v1481 = vadd.f32 %v1382, %v1480
          %v1482 = vpop.f32.mrb[0].mxu0
          %v1483 = vadd.f32 %v1382, %v1482
          %1484 = vdwg.mxu0
          %1485 = vmatprep.subr.mxu0 %v1341
          %1486 = vmatpush1.msra.mxu0 %v1340
          %1487 = vmatprep.subr.mxu0 %v1345
          %1488 = vmatpush1.msra.mxu0 %v1344
          %1489 = vmatprep.subr.mxu0 %v1349
          %1490 = vmatpush1.msra.mxu0 %v1348
          %1491 = vmatprep.subr.mxu0 %v1353
          %1492 = vmatpush1.msra.mxu0 %v1352
          %1493 = vmatprep.subr.mxu0 0.0
          %1494 = vmatpush1.msra.mxu0 0.0
          %1495 = vmatprep.subr.mxu0 0.0
          %1496 = vmatpush1.msra.mxu0 0.0
          %1497 = vmatprep.subr.mxu0 0.0
          %1498 = vmatpush1.msra.mxu0 0.0
          %1499 = vmatprep.subr.mxu0 0.0
          %1500 = vmatpush1.msra.mxu0 0.0
          %1501 = vmatprep.subr.mxu0 0.0
          %1502 = vmatpush1.msra.mxu0 0.0
          %1503 = vmatprep.subr.mxu0 0.0
          %1504 = vmatpush1.msra.mxu0 0.0
          %1505 = vmatprep.subr.mxu0 0.0
          %1506 = vmatpush1.msra.mxu0 0.0
          %1507 = vmatprep.subr.mxu0 0.0
          %1508 = vmatpush1.msra.mxu0 0.0
          %1509 = vmatprep.subr.mxu0 0.0
          %1510 = vmatpush1.msra.mxu0 0.0
          %1511 = vmatprep.subr.mxu0 0.0
          %1512 = vmatpush1.msra.mxu0 0.0
          %1513 = vmatprep.subr.mxu0 0.0
          %1514 = vmatpush1.msra.mxu0 0.0
          %1515 = vmatprep.subr.mxu0 0.0
          %1516 = vmatpush1.msra.mxu0 0.0
          %1517 = vmatprep.subr.mxu0 0.0
          %1518 = vmatpush1.msra.mxu0 0.0
          %1519 = vmatprep.subr.mxu0 0.0
          %1520 = vmatpush1.msra.mxu0 0.0
          %1521 = vmatprep.subr.mxu0 0.0
          %1522 = vmatpush1.msra.mxu0 0.0
          %1523 = vmatprep.subr.mxu0 0.0
          %1524 = vmatpush1.msra.mxu0 0.0
          %1525 = vmatprep.subr.mxu0 0.0
          %1526 = vmatpush1.msra.mxu0 0.0
          %1527 = vmatprep.subr.mxu0 0.0
          %1528 = vmatpush1.msra.mxu0 0.0
          %1529 = vmatprep.subr.mxu0 0.0
          %1530 = vmatpush1.msra.mxu0 0.0
          %1531 = vmatprep.subr.mxu0 0.0
          %1532 = vmatpush1.msra.mxu0 0.0
          %1533 = vmatprep.subr.mxu0 0.0
          %1534 = vmatpush1.msra.mxu0 0.0
          %1535 = vmatprep.subr.mxu0 0.0
          %1536 = vmatpush1.msra.mxu0 0.0
          %1537 = vmatprep.subr.mxu0 0.0
          %1538 = vmatpush1.msra.mxu0 0.0
          %1539 = vmatprep.subr.mxu0 0.0
          %1540 = vmatpush1.msra.mxu0 0.0
          %1541 = vmatprep.subr.mxu0 0.0
          %1542 = vmatpush1.msra.mxu0 0.0
          %1543 = vmatprep.subr.mxu0 0.0
          %1544 = vmatpush1.msra.mxu0 0.0
          %1545 = vmatprep.subr.mxu0 0.0
          %1546 = vmatpush1.msra.mxu0 0.0
          %1547 = vmatprep.subr.mxu0 0.0
          %1548 = vmatpush1.msra.mxu0 0.0
          %1549 = vmatprep.mubr.f32.mxu0 0.0
          %1550 = vmatmul.mubr.f32.gmra.mrb[0].mxu0 %v1385
          %v1551 = vpop.f32.mrb[0].mxu0
          %v1552 = vadd.f32 %v1367, %v1551
          %v1553 = vpop.f32.mrb[0].mxu0
          %v1554 = vadd.f32 %v1367, %v1553
          %1555 = vmatprep.mubr.f32.mxu0 0.0
          %1556 = vmatmul.mubr.f32.gmra.mrb[0].mxu0 %v1388
          %v1557 = vpop.f32.mrb[0].mxu0
          %v1558 = vadd.f32 %v1372, %v1557
          %v1559 = vpop.f32.mrb[0].mxu0
          %v1560 = vadd.f32 %v1372, %v1559
          %1561 = vmatprep.mubr.f32.mxu0 0.0
          %1562 = vmatmul.mubr.f32.gmra.mrb[0].mxu0 %v1391
          %v1563 = vpop.f32.mrb[0].mxu0
          %v1564 = vadd.f32 %v1377, %v1563
          %v1565 = vpop.f32.mrb[0].mxu0
          %v1566 = vadd.f32 %v1377, %v1565
          %1567 = vmatprep.mubr.f32.mxu0 0.0
          %1568 = vmatmul.mubr.f32.gmra.mrb[0].mxu0 %v1394
          %v1569 = vpop.f32.mrb[0].mxu0
          %v1570 = vadd.f32 %v1382, %v1569
          %v1571 = vpop.f32.mrb[0].mxu0
          %v1572 = vadd.f32 %v1382, %v1571
          %1573 = vdwg.mxu0
          %v1574 = vtanh.pop %v1463
          %v1575 = vtanh.pop %v1465
          %v1576 = vtanh.pop %v1552
          %v1577 = vtanh.pop %v1554
          %v1578 = vtanh.pop %v1469
          %v1579 = vtanh.pop %v1471
          %v1580 = vtanh.pop %v1558
          %v1581 = vtanh.pop %v1560
          %v1582 = vtanh.pop %v1475
          %v1583 = vtanh.pop %v1477
          %v1584 = vtanh.pop %v1564
          %v1585 = vtanh.pop %v1566
          %v1586 = vtanh.pop %v1481
          %v1587 = vtanh.pop %v1483
          %v1588 = vtanh.pop %v1570
          %v1589 = vtanh.pop %v1572
          %1591 = vset.pattern.permute.xlu0 0
          %1592 = vperm.xlu0 %1591, %v286
          %v1593 = vpop.permute.xlu0 %1592
          %1596 = vset.pattern.permute.xlu0 0
          %1597 = vperm.xlu0 %1596, %v287
          %v1598 = vpop.permute.xlu0 %1597
          %1601 = vset.pattern.permute.xlu0 0
          %1602 = vperm.xlu0 %1601, %v288
          %v1603 = vpop.permute.xlu0 %1602
          %1606 = vset.pattern.permute.xlu0 0
          %1607 = vperm.xlu0 %1606, %v289
          %v1608 = vpop.permute.xlu0 %1607
          %v1610 = vmul.f32 %v1574, %v1593
          %v1611 = vmul.f32 %v1575, %v1593
          %v1612 = vmul.f32 %v1576, %v1593
          %v1613 = vmul.f32 %v1577, %v1593
          %v1614 = vmul.f32 %v1578, %v1598
          %v1615 = vmul.f32 %v1579, %v1598
          %v1616 = vmul.f32 %v1580, %v1598
          %v1617 = vmul.f32 %v1581, %v1598
          %v1618 = vmul.f32 %v1582, %v1603
          %v1619 = vmul.f32 %v1583, %v1603
          %v1620 = vmul.f32 %v1584, %v1603
          %v1621 = vmul.f32 %v1585, %v1603
          %v1622 = vmul.f32 %v1586, %v1608
          %v1623 = vmul.f32 %v1587, %v1608
          %v1624 = vmul.f32 %v1588, %v1608
          %v1625 = vmul.f32 %v1589, %v1608
          %v1626 = vadd.f32 %v1610, %v1614
          %v1627 = vadd.f32 %v1626, %v1618
          %v1628 = vadd.f32 %v1627, %v1622
          %v1629 = vrot.slane %v1628, 4
          %v1630 = vadd.f32 %v1628, %v1629
          %v1631 = vrot.slane %v1630, 2
          %v1632 = vadd.f32 %v1630, %v1631
          %v1633 = vrot.slane %v1632, 1
          %v1634 = vadd.f32 %v1632, %v1633
          %v1635 = vadd.f32 %v1611, %v1615
          %v1636 = vadd.f32 %v1635, %v1619
          %v1637 = vadd.f32 %v1636, %v1623
          %v1638 = vrot.slane %v1637, 4
          %v1639 = vadd.f32 %v1637, %v1638
          %v1640 = vrot.slane %v1639, 2
          %v1641 = vadd.f32 %v1639, %v1640
          %v1642 = vrot.slane %v1641, 1
          %v1643 = vadd.f32 %v1641, %v1642
          %v1644 = vadd.f32 %v1612, %v1616
          %v1645 = vadd.f32 %v1644, %v1620
          %v1646 = vadd.f32 %v1645, %v1624
          %v1647 = vrot.slane %v1646, 4
          %v1648 = vadd.f32 %v1646, %v1647
          %v1649 = vrot.slane %v1648, 2
          %v1650 = vadd.f32 %v1648, %v1649
          %v1651 = vrot.slane %v1650, 1
          %v1652 = vadd.f32 %v1650, %v1651
          %v1653 = vadd.f32 %v1613, %v1617
          %v1654 = vadd.f32 %v1653, %v1621
          %v1655 = vadd.f32 %v1654, %v1625
          %v1656 = vrot.slane %v1655, 4
          %v1657 = vadd.f32 %v1655, %v1656
          %v1658 = vrot.slane %v1657, 2
          %v1659 = vadd.f32 %v1657, %v1658
          %v1660 = vrot.slane %v1659, 1
          %v1661 = vadd.f32 %v1659, %v1660
          %v1662 = vstv %s290
          %v1663 = vadd.f32 %v1634, %v1662
          %v1664 = vadd.f32 %v1643, %v1662
          %v1665 = vadd.f32 %v1652, %v1662
          %v1666 = vadd.f32 %v1661, %v1662
          %v1667 = vsub.f32 %v301, 1.0
          %v1668 = vmul.f32 %v301, %v1667
          %v1670 = vlaneseq
          %v1671 = vshrl.u32 %v1670, 7
          %v1672 = vsub.s32 0, %v1671
          %v1673 = vrot.slane %v1668, %v1672
          %v1674 = vlaneseq
          %v1675 = vshrl.u32 %v1674, 7
          %v1676 = vsub.s32 1, %v1675
          %v1677 = vrot.slane %v1668, %v1676
          %v1678 = vlaneseq
          %v1679 = vshrl.u32 %v1678, 7
          %v1680 = vsub.s32 2, %v1679
          %v1681 = vrot.slane %v1668, %v1680
          %v1682 = vlaneseq
          %v1683 = vshrl.u32 %v1682, 7
          %v1684 = vsub.s32 3, %v1683
          %v1685 = vrot.slane %v1668, %v1684
          %v1690 = vmul.f32 %v1663, %v1673
          %v1691 = vmul.f32 %v1664, %v1677
          %v1692 = vmul.f32 %v1665, %v1681
          %v1693 = vmul.f32 %v1666, %v1685
          %v1698 = vcombine.low %v1690, %v1691
          %v1699 = vcombine.low %v1692, %v1693
          %v1701 = vunpack.c.l.s4 1966171168
          %v1702 = vunpack.c.0.s8 %v1701
          %v1703 = vlaneseq
          %v1704 = vshrl.u32 %v1703, 7
          %v1705 = vsub.s32 %v1702, %v1704
          %v1706 = vrot.slane %v1698, %v1705
          %v1708 = vunpack.c.l.s4 1966171168
          %v1709 = vunpack.c.0.s8 %v1708
          %v1710 = vlaneseq
          %v1711 = vshrl.u32 %v1710, 7
          %v1712 = vsub.s32 %v1709, %v1711
          %v1713 = vrot.slane %v1699, %v1712
          %v1714 = vcombine.low %v1706, %v1713
          %v1716 = vunpack.c.l.s4 1966171168
          %v1717 = vunpack.c.0.s8 %v1716
          %v1718 = vlaneseq
          %v1719 = vshrl.u32 %v1718, 7
          %v1720 = vsub.s32 %v1717, %v1719
          %v1721 = vrot.slane %v1714, %v1720
          %s1723 = scalar_lea.vmem %s271, %s298 [#allocation3]
          %v1724 = vlaneseq
          %vm1725 = vcmp.ge.s32.totalorder %v1724, 0
          %vm1726 = vcmp.lt.s32.totalorder %v1724, 512
          %vm1727 = vmand %vm1725, %vm1726
          %1728 = vst.msk [vmem:[%s1723] sm:$0xf] %vm1727, %v1721
        $region53: #{tpu_custom_call.1} parent=47 // loop_footer
          %s296 = sadd.s32 1, %s292
        $region54: #{tpu_custom_call.1} parent=47 // loop_footer_branch
          %291 = sbr.rel target = $region50
        $region55: #{tpu_custom_call.1} parent=47 // loop_exit
          _
        %s1729 = sand.u32 %s182, 1
        %s1730 = scalar_lea.sflag [#allocation4], %s1729
        %s1731 = sand.u32 %s182, 1
        %s1732 = smul.addr %s1731, 8
        %s1733 = scalar_lea.vmem [#allocation3], %s1732
        // Predicated region
        $region56: #{tpu_custom_call.1} parent=47 // pred_check
          %p1734 = pneg %p192
        $region57: #{tpu_custom_call.1} parent=47 // pred_check_branch
          %1736 = sbr.rel (%p1734) target = $region59
        $region58: #{tpu_custom_call.1} parent=47 // pred_region
          %s1737 = smul.u32 8, %s22
          %s1739 = ssub.s32 128, 128
          %1740 = vsyncadd %s1730, %s1739
          %s1741 = smul.addr %s1737, 16
          %s1742 = scalar_lea.hbm %s7, %s1741
          %s1744 = sshll.u32 %s1733, 4
          %s1745 = int_to_ptr.vmem [resolvable:$true] %s1744
          %1747 = dma.vmem_to_hbm [thread:$0]  %s1745, 128, %s1742, %s1730
        $region59: #{tpu_custom_call.1} parent=47 // pred_fallthru
          _
      $region48: #{tpu_custom_call.1} parent=5 // pred_fallthru
        _
      %p1748 = scmp.le.s32.totalorder 2, %s17
      // Predicated region
      $region60: #{tpu_custom_call.1} parent=5 // pred_check
        %p1749 = pneg %p1748
      $region61: #{tpu_custom_call.1} parent=5 // pred_check_branch
        %1751 = sbr.rel (%p1749) target = $region63
      $region62: #{tpu_custom_call.1} parent=5 // pred_region
        %s1752 = ssub.s32 %s17, 2
        // Predicated region
        $region64: #{tpu_custom_call.1} parent=62 // pred_check
          %p1753 = pneg %p198
        $region65: #{tpu_custom_call.1} parent=62 // pred_check_branch
          %1755 = sbr.rel (%p1753) target = $region67
        $region66: #{tpu_custom_call.1} parent=62 // pred_region
          %s1756 = sand.u32 %s183, 1
          %s1757 = scalar_lea.sflag [#allocation4], %s1756
          %s1758 = sand.u32 %s183, 1
          %s1759 = smul.addr %s1758, 8
          %s1760 = scalar_lea.vmem [#allocation3], %s1759
          %1761 = dma.done %s1757, 128
        $region67: #{tpu_custom_call.1} parent=62 // pred_fallthru
          _
      $region63: #{tpu_custom_call.1} parent=5 // pred_fallthru
        _
    $region6: #{tpu_custom_call.1} parent=1 // loop_footer
      %s21 = sadd.s32 1, %s17
    $region7: #{tpu_custom_call.1} parent=1 // loop_footer_branch
      %16 = sbr.rel target = $region3
    $region8: #{tpu_custom_call.1} parent=1 // loop_exit
      _
    %1762 = vsyncpa [#allocation4], 1
    %s1763 = scalar_lea.sflag [#allocation4], 1
    %1764 = vsyncpa %s1763, 1

</llo_original>
